<compile_context>
chip_gen: v6e
topology: v6e:2x2x1
jax: 0.10.0
libtpu: 0.0.40
codegen_flags: <defaults>
</compile_context>

<pallas_src>
import jax
import jax.numpy as jnp
from jax import lax
from jax.experimental import pallas as pl
from jax.experimental.pallas import tpu as pltpu

INPUT_SIZE = 128  # fixed by the module
BN_EPS = 1e-5

_VMEM_LIMIT = 32 * 1024 * 1024
_GX_CHUNK_BUDGET = 12 * 1024 * 1024   # bytes for the double-buffered gx chunk
_PROJ_OUT_BUDGET = 8 * 1024 * 1024    # bytes for the double-buffered gx out block


def _round_up(v, m):
    return ((v + m - 1) // m) * m


def _pick_chunk(n, cap, align=1):
    """Largest c <= cap with c % align == 0 and n % c == 0; fallback: n."""
    cap = max(cap, align)
    c = (cap // align) * align
    while c >= align:
        if n % c == 0:
            return c
        c -= align
    return n  # one chunk spanning the full axis (block dim == full dim is legal)


# --------------------- Kernel 1: hoisted input projection ---------------------
def _input_proj_kernel(x_ref, w_ih_ref, b_ref, gx_ref):
    # x_ref : (1, Tc, 128) f32  -- one batch element's contiguous time chunk
    # w_ih  : (128, 4*Hp)  bf16 -- W_ih^T, per-gate zero-padded
    # b     : (1, 4*Hp)    f32  -- b_ih + b_hh (hoisted out of the recurrence)
    # gx    : (Tc, 4*Hp)   f32  -- written time-major into gx2d (T, B*4*Hp)
    x_blk = x_ref[0].astype(jnp.bfloat16)
    gx_ref[...] = (
        jnp.dot(x_blk, w_ih_ref[...], preferred_element_type=jnp.float32)
        + b_ref[...])


# -------------- Kernel 2: LSTM recurrence + BatchNorm + pitch head ------------
def _lstm_tail_kernel(gx_ref, w_hh_ref, gamma_ref, beta_ref, w_out_ref,
                      b_out_ref, out_ref, h_sc, c_sc):
    # gx_ref : (Tc, B, 4*Hp) f32  pre-projected gates, time on the leading axis
    # w_hh   : (Hp, 4*Hp)    bf16
    # out    : (B, 128)      f32
    # h_sc/c_sc : (B, Hp)    f32  state carried across the time-chunk grid
    tc = gx_ref.shape[0]
    hp = w_hh_ref.shape[0]

    @pl.when(pl.program_id(0) == 0)
    def _init():
        h_sc[...] = jnp.zeros_like(h_sc)
        c_sc[...] = jnp.zeros_like(c_sc)

    h = h_sc[...]
    c = c_sc[...]

    # Fully unrolled (static) recurrence over the chunk: one MXU matmul per step
    # plus lane-aligned (128-wide) gate slices; the scheduler can overlap the
    # EUP/VPU gate math with the next step's gx load and the MXU drain.
    # W_hh is read from the ref per step (cheap VMEM vld) instead of being held
    # live in vregs across the whole unrolled chunk.
    for t in range(tc):
        gates = gx_ref[t] + jnp.dot(h.astype(jnp.bfloat16), w_hh_ref[...],
                                    preferred_element_type=jnp.float32)  # (B, 4Hp)
        i_g = jax.nn.sigmoid(gates[:, 0 * hp:1 * hp])
        f_g = jax.nn.sigmoid(gates[:, 1 * hp:2 * hp])
        g_g = jnp.tanh(gates[:, 2 * hp:3 * hp])
        o_g = jax.nn.sigmoid(gates[:, 3 * hp:4 * hp])
        c = f_g * c + i_g * g_g
        h = o_g * jnp.tanh(c)

    h_sc[...] = h
    c_sc[...] = c

    @pl.when(pl.program_id(0) == pl.num_programs(0) - 1)
    def _finalize():
        h_last = h
        # BatchNorm1d, training-mode forward: batch mean / biased batch variance.
        mean = jnp.mean(h_last, axis=0, keepdims=True)
        var = jnp.mean((h_last - mean) ** 2, axis=0, keepdims=True)
        h_norm = (h_last - mean) * lax.rsqrt(var + BN_EPS)
        h_norm = h_norm * gamma_ref[...] + beta_ref[...]
        # pitch_layer: Linear(H -> 128) + Sigmoid
        logits = (jnp.dot(h_norm.astype(jnp.bfloat16), w_out_ref[...],
                          preferred_element_type=jnp.float32)
                  + b_out_ref[...])
        out_ref[...] = jax.nn.sigmoid(logits)


# --------------------------------- wrapper ------------------------------------
def init_params(key, hidden_size=64, input_size=INPUT_SIZE, dtype=jnp.float32):
    """Deterministic parameter init mimicking PyTorch shapes (U(-1/sqrt(H), 1/sqrt(H)))."""
    H, F = hidden_size, input_size
    ks = jax.random.split(key, 6)
    s = 1.0 / jnp.sqrt(jnp.array(H, dtype))
    u = lambda k, shape: jax.random.uniform(k, shape, dtype, -s, s)
    return {
        "w_ih": u(ks[0], (4 * H, F)),   # nn.LSTM weight_ih_l0
        "w_hh": u(ks[1], (4 * H, H)),   # nn.LSTM weight_hh_l0
        "b_ih": u(ks[2], (4 * H,)),     # nn.LSTM bias_ih_l0
        "b_hh": u(ks[3], (4 * H,)),     # nn.LSTM bias_hh_l0
        "gamma": jnp.ones((H,), dtype),   # BatchNorm1d weight
        "beta": jnp.zeros((H,), dtype),   # BatchNorm1d bias
        "w_out": u(ks[4], (F, H)),      # Linear(H, 128) weight
        "b_out": u(ks[5], (F,)),        # Linear(H, 128) bias
    }


def _pad_gate_cols(w_t, h, hp):
    """(in_dim, 4h) -> (in_dim, 4hp), zero-padding each of the i/f/g/o blocks."""
    in_dim = w_t.shape[0]
    w4 = w_t.reshape(in_dim, 4, h)
    w4 = jnp.pad(w4, ((0, 0), (0, 0), (0, hp - h)))
    return w4.reshape(in_dim, 4 * hp)


def piano_roll_lstm_forward(x, params):
    """x: (B, T, 128) float32, batch_first like the PyTorch module. Returns (B, 128)."""
    B, T, F = x.shape
    assert F == INPUT_SIZE
    H = params["w_hh"].shape[1]
    Hp = _round_up(max(H, 128), 128)   # lane-aligned gate slices
    G = 4 * Hp
    f32, bf16 = jnp.float32, jnp.bfloat16

    # Weight prep (tiny, plain JAX): transpose, per-gate zero-pad, bf16 for MXU.
    w_ih_t = _pad_gate_cols(params["w_ih"].T.astype(f32), H, Hp).astype(bf16)      # (128, 4Hp)
    w_hh_t = _pad_gate_cols(params["w_hh"].T.astype(f32), H, Hp)                   # (H, 4Hp)
    w_hh_t = jnp.pad(w_hh_t, ((0, Hp - H), (0, 0))).astype(bf16)                   # (Hp, 4Hp)
    bias = _pad_gate_cols((params["b_ih"] + params["b_hh"]).astype(f32)[None, :],
                          H, Hp)                                                   # (1, 4Hp)
    gamma = jnp.pad(params["gamma"].astype(f32), (0, Hp - H))[None, :]             # (1, Hp)
    beta = jnp.pad(params["beta"].astype(f32), (0, Hp - H))[None, :]               # (1, Hp)
    w_out_t = jnp.pad(params["w_out"].T.astype(f32),
                      ((0, Hp - H), (0, 0))).astype(bf16)                          # (Hp, 128)
    b_out = params["b_out"].astype(f32)[None, :]                                   # (1, 128)

    x = x.astype(f32)

    # ---- Phase 1: one large streamed GEMM, written directly time-major ----
    cap_p = max(8, min(256, _PROJ_OUT_BUDGET // (2 * G * 4)))
    tc_p = _pick_chunk(T, cap=cap_p, align=8)
    gx2d = pl.pallas_call(
        _input_proj_kernel,
        out_shape=jax.ShapeDtypeStruct((T, B * G), f32),
        grid=(T // tc_p, B),
        in_specs=[
            pl.BlockSpec((1, tc_p, INPUT_SIZE), lambda ti, b: (b, ti, 0)),
            pl.BlockSpec((INPUT_SIZE, G), lambda ti, b: (0, 0)),
            pl.BlockSpec((1, G), lambda ti, b: (0, 0)),
        ],
        out_specs=pl.BlockSpec((tc_p, G), lambda ti, b: (ti, b)),
        compiler_params=pltpu.CompilerParams(
            dimension_semantics=("parallel", "parallel"),
            vmem_limit_bytes=_VMEM_LIMIT),
    )(x, w_ih_t, bias)
    gx = gx2d.reshape(T, B, G)   # row-major compatible (free) reshape

    # ---- Phase 2: serial recurrence over time chunks + BN + pitch head ----
    # Chunk sized so the double-buffered gx chunk stays within the VMEM budget,
    # while being as large as possible (<= 64) to amortize per-grid-step cost.
    bytes_per_step = B * G * 4
    cap_r = max(1, min(64, _GX_CHUNK_BUDGET // (2 * bytes_per_step)))
    tc_r = _pick_chunk(T, cap=cap_r, align=1)
    out = pl.pallas_call(
        _lstm_tail_kernel,
        out_shape=jax.ShapeDtypeStruct((B, INPUT_SIZE), f32),
        grid=(T // tc_r,),
        in_specs=[
            pl.BlockSpec((tc_r, B, G), lambda i: (i, 0, 0)),     # gx chunk (double-buffered)
            pl.BlockSpec((Hp, G), lambda i: (0, 0)),             # W_hh^T (resident)
            pl.BlockSpec((1, Hp), lambda i: (0, 0)),             # gamma
            pl.BlockSpec((1, Hp), lambda i: (0, 0)),             # beta
            pl.BlockSpec((Hp, INPUT_SIZE), lambda i: (0, 0)),    # W_out^T
            pl.BlockSpec((1, INPUT_SIZE), lambda i: (0, 0)),     # b_out
        ],
        out_specs=pl.BlockSpec((B, INPUT_SIZE), lambda i: (0, 0)),
        scratch_shapes=[pltpu.VMEM((B, Hp), f32),   # h state
                        pltpu.VMEM((B, Hp), f32)],  # c state
        compiler_params=pltpu.CompilerParams(
            dimension_semantics=("arbitrary",),
            vmem_limit_bytes=_VMEM_LIMIT),
    )(gx, w_hh_t, gamma, beta, w_out_t, b_out)
    return out


if __name__ == "__main__":
    B, T, H = 4, 8, 32   # small shapes; input feature size fixed at 128 by the module
    key = jax.random.PRNGKey(0)
    k_x, k_p = jax.random.split(key)
    x = jax.random.normal(k_x, (B, T, INPUT_SIZE), jnp.float32)
    params = init_params(k_p, hidden_size=H)

    out = jax.jit(piano_roll_lstm_forward)(x, params)
    out = jax.block_until_ready(out)
    assert out.shape == (B, INPUT_SIZE)
    assert bool(jnp.all(jnp.isfinite(out)))
    print("KERNEL_OK")
</pallas_src>

<mosaic_0001>
module attributes {stable_mosaic.version = 11 : i64} {
  func.func @_input_proj_kernel(%arg0: i32, %arg1: i32, %arg2: memref<1x8x128xf32, #tpu.memory_space<vmem>>, %arg3: memref<128x512xbf16, #tpu.memory_space<vmem>>, %arg4: memref<1x512xf32, #tpu.memory_space<vmem>>, %arg5: memref<8x512xf32, #tpu.memory_space<vmem>>) attributes {dimension_semantics = [#tpu.dimension_semantics<parallel>, #tpu.dimension_semantics<parallel>], iteration_bounds = array<i64: 1, 4>, scalar_prefetch = 0 : i64, scratch_operands = 0 : i64, tpu.core_type = #tpu.core_type<tc>, window_params = [{transform_indices = @transform_0, window_bounds = array<i64: 1, 8, 128>}, {pipeline_mode = #tpu.pipeline_mode<synchronous>, transform_indices = @transform_1, window_bounds = array<i64: 128, 512>}, {pipeline_mode = #tpu.pipeline_mode<synchronous>, transform_indices = @transform_2, window_bounds = array<i64: 1, 512>}, {transform_indices = @transform_3, window_bounds = array<i64: 8, 512>}]} {
    %c0 = arith.constant 0 : index
    %c0_0 = arith.constant 0 : index
    %c0_1 = arith.constant 0 : index
    %0 = vector.load %arg2[%c0, %c0_0, %c0_1] : memref<1x8x128xf32, #tpu.memory_space<vmem>>, vector<1x8x128xf32>
    %1 = vector.shape_cast %0 : vector<1x8x128xf32> to vector<8x128xf32>
    %2 = arith.truncf %1 : vector<8x128xf32> to vector<8x128xbf16>
    %c0_2 = arith.constant 0 : index
    %c0_3 = arith.constant 0 : index
    %3 = vector.load %arg3[%c0_2, %c0_3] : memref<128x512xbf16, #tpu.memory_space<vmem>>, vector<128x512xbf16>
    %cst = arith.constant dense<0.000000e+00> : vector<8x512xf32>
    %4 = tpu.matmul %2, %3, %cst {dimension_numbers = #tpu.dot_dimension_numbers<[1], [0], [0], [1], [0, 0, 1, 1], [], []>} : vector<8x128xbf16>, vector<128x512xbf16>, vector<8x512xf32> -> vector<8x512xf32>
    %c0_4 = arith.constant 0 : index
    %c0_5 = arith.constant 0 : index
    %5 = vector.load %arg4[%c0_4, %c0_5] : memref<1x512xf32, #tpu.memory_space<vmem>>, vector<1x512xf32>
    %6 = vector.broadcast %5 : vector<1x512xf32> to vector<8x512xf32>
    %7 = arith.addf %4, %6 : vector<8x512xf32>
    %c0_6 = arith.constant 0 : index
    %c0_7 = arith.constant 0 : index
    %8 = vector.load %arg5[%c0_6, %c0_7] : memref<8x512xf32, #tpu.memory_space<vmem>>, vector<8x512xf32>
    tpu.vector_store %arg5[%c0_6, %c0_7], %7 {strides = array<i32>} : memref<8x512xf32, #tpu.memory_space<vmem>>, vector<8x512xf32>,
    return
  }
  func.func @transform_0(%arg0: i32, %arg1: i32) -> (i32, i32, i32) {
    %c0_i32 = arith.constant 0 : i32
    %c0_i32_0 = arith.constant 0 : i32
    return %arg1, %arg0, %c0_i32 : i32, i32, i32
  }
  func.func @transform_1(%arg0: i32, %arg1: i32) -> (i32, i32) {
    %c0_i32 = arith.constant 0 : i32
    %c0_i32_0 = arith.constant 0 : i32
    %c0_i32_1 = arith.constant 0 : i32
    return %c0_i32, %c0_i32_0 : i32, i32
  }
  func.func @transform_2(%arg0: i32, %arg1: i32) -> (i32, i32) {
    %c0_i32 = arith.constant 0 : i32
    %c0_i32_0 = arith.constant 0 : i32
    %c0_i32_1 = arith.constant 0 : i32
    return %c0_i32, %c0_i32_0 : i32, i32
  }
  func.func @transform_3(%arg0: i32, %arg1: i32) -> (i32, i32) {
    %c0_i32 = arith.constant 0 : i32
    return %arg0, %arg1 : i32, i32
  }
}

module attributes {stable_mosaic.version = 11 : i64} {
  func.func @_lstm_tail_kernel(%arg0: i32, %arg1: memref<8x4x512xf32, #tpu.memory_space<vmem>>, %arg2: memref<128x512xbf16, #tpu.memory_space<vmem>>, %arg3: memref<1x128xf32, #tpu.memory_space<vmem>>, %arg4: memref<1x128xf32, #tpu.memory_space<vmem>>, %arg5: memref<128x128xbf16, #tpu.memory_space<vmem>>, %arg6: memref<1x128xf32, #tpu.memory_space<vmem>>, %arg7: memref<4x128xf32, #tpu.memory_space<vmem>>, %arg8: memref<4x128xf32, #tpu.memory_space<vmem>>, %arg9: memref<4x128xf32, #tpu.memory_space<vmem>>) attributes {dimension_semantics = [#tpu.dimension_semantics<arbitrary>], iteration_bounds = array<i64: 1>, scalar_prefetch = 0 : i64, scratch_operands = 2 : i64, tpu.core_type = #tpu.core_type<tc>, window_params = [{transform_indices = @transform_0, window_bounds = array<i64: 8, 4, 512>}, {pipeline_mode = #tpu.pipeline_mode<synchronous>, transform_indices = @transform_1, window_bounds = array<i64: 128, 512>}, {pipeline_mode = #tpu.pipeline_mode<synchronous>, transform_indices = @transform_2, window_bounds = array<i64: 1, 128>}, {pipeline_mode = #tpu.pipeline_mode<synchronous>, transform_indices = @transform_3, window_bounds = array<i64: 1, 128>}, {pipeline_mode = #tpu.pipeline_mode<synchronous>, transform_indices = @transform_4, window_bounds = array<i64: 128, 128>}, {pipeline_mode = #tpu.pipeline_mode<synchronous>, transform_indices = @transform_5, window_bounds = array<i64: 1, 128>}, {pipeline_mode = #tpu.pipeline_mode<synchronous>, transform_indices = @transform_6, window_bounds = array<i64: 4, 128>}]} {
    %c0_i32 = arith.constant 0 : i32
    %0 = arith.cmpi eq, %arg0, %c0_i32 : i32
    %1 = arith.extui %0 : i1 to i32
    %c0_i32_0 = arith.constant 0 : i32
    %2 = arith.cmpi ne, %1, %c0_i32_0 : i32
    scf.if %2 {
      %cst_74 = arith.constant 0.000000e+00 : f32
      %258 = vector.broadcast %cst_74 : f32 to vector<4x128xf32>
      %c0_75 = arith.constant 0 : index
      %c0_76 = arith.constant 0 : index
      %259 = vector.load %arg8[%c0_75, %c0_76] : memref<4x128xf32, #tpu.memory_space<vmem>>, vector<4x128xf32>
      tpu.vector_store %arg8[%c0_75, %c0_76], %258 {strides = array<i32>} : memref<4x128xf32, #tpu.memory_space<vmem>>, vector<4x128xf32>,
      %cst_77 = arith.constant 0.000000e+00 : f32
      %260 = vector.broadcast %cst_77 : f32 to vector<4x128xf32>
      %c0_78 = arith.constant 0 : index
      %c0_79 = arith.constant 0 : index
      %261 = vector.load %arg9[%c0_78, %c0_79] : memref<4x128xf32, #tpu.memory_space<vmem>>, vector<4x128xf32>
      tpu.vector_store %arg9[%c0_78, %c0_79], %260 {strides = array<i32>} : memref<4x128xf32, #tpu.memory_space<vmem>>, vector<4x128xf32>,
    } else {
    }
    %c0 = arith.constant 0 : index
    %c0_1 = arith.constant 0 : index
    %3 = vector.load %arg8[%c0, %c0_1] : memref<4x128xf32, #tpu.memory_space<vmem>>, vector<4x128xf32>
    %c0_2 = arith.constant 0 : index
    %c0_3 = arith.constant 0 : index
    %4 = vector.load %arg9[%c0_2, %c0_3] : memref<4x128xf32, #tpu.memory_space<vmem>>, vector<4x128xf32>
    %c0_4 = arith.constant 0 : index
    %c0_5 = arith.constant 0 : index
    %c0_6 = arith.constant 0 : index
    %5 = vector.load %arg1[%c0_4, %c0_5, %c0_6] : memref<8x4x512xf32, #tpu.memory_space<vmem>>, vector<1x4x512xf32>
    %6 = vector.shape_cast %5 : vector<1x4x512xf32> to vector<4x512xf32>
    %7 = arith.truncf %3 : vector<4x128xf32> to vector<4x128xbf16>
    %c0_7 = arith.constant 0 : index
    %c0_8 = arith.constant 0 : index
    %8 = vector.load %arg2[%c0_7, %c0_8] : memref<128x512xbf16, #tpu.memory_space<vmem>>, vector<128x512xbf16>
    %cst = arith.constant dense<0.000000e+00> : vector<4x512xf32>
    %9 = tpu.matmul %7, %8, %cst {dimension_numbers = #tpu.dot_dimension_numbers<[1], [0], [0], [1], [0, 0, 1, 1], [], []>} : vector<4x128xbf16>, vector<128x512xbf16>, vector<4x512xf32> -> vector<4x512xf32>
    %10 = arith.addf %6, %9 : vector<4x512xf32>
    %11 = vector.extract_strided_slice %10 {offsets = [0, 0], sizes = [4, 128], strides = [1, 1]} : vector<4x512xf32> to vector<4x128xf32>
    %12 = arith.negf %11 : vector<4x128xf32>
    %13 = math.exp %12 : vector<4x128xf32>
    %cst_9 = arith.constant 1.000000e+00 : f32
    %14 = vector.broadcast %cst_9 : f32 to vector<4x128xf32>
    %15 = arith.addf %14, %13 : vector<4x128xf32>
    %16 = arith.divf %14, %15 : vector<4x128xf32>
    %17 = vector.extract_strided_slice %10 {offsets = [0, 128], sizes = [4, 128], strides = [1, 1]} : vector<4x512xf32> to vector<4x128xf32>
    %18 = arith.negf %17 : vector<4x128xf32>
    %19 = math.exp %18 : vector<4x128xf32>
    %cst_10 = arith.constant 1.000000e+00 : f32
    %20 = vector.broadcast %cst_10 : f32 to vector<4x128xf32>
    %21 = arith.addf %20, %19 : vector<4x128xf32>
    %22 = arith.divf %20, %21 : vector<4x128xf32>
    %23 = vector.extract_strided_slice %10 {offsets = [0, 256], sizes = [4, 128], strides = [1, 1]} : vector<4x512xf32> to vector<4x128xf32>
    %24 = math.tanh %23 : vector<4x128xf32>
    %25 = vector.extract_strided_slice %10 {offsets = [0, 384], sizes = [4, 128], strides = [1, 1]} : vector<4x512xf32> to vector<4x128xf32>
    %26 = arith.negf %25 : vector<4x128xf32>
    %27 = math.exp %26 : vector<4x128xf32>
    %cst_11 = arith.constant 1.000000e+00 : f32
    %28 = vector.broadcast %cst_11 : f32 to vector<4x128xf32>
    %29 = arith.addf %28, %27 : vector<4x128xf32>
    %30 = arith.divf %28, %29 : vector<4x128xf32>
    %31 = arith.mulf %22, %4 : vector<4x128xf32>
    %32 = arith.mulf %16, %24 : vector<4x128xf32>
    %33 = arith.addf %31, %32 : vector<4x128xf32>
    %34 = math.tanh %33 : vector<4x128xf32>
    %35 = arith.mulf %30, %34 : vector<4x128xf32>
    %c1 = arith.constant 1 : index
    %c0_12 = arith.constant 0 : index
    %c0_13 = arith.constant 0 : index
    %36 = vector.load %arg1[%c1, %c0_12, %c0_13] : memref<8x4x512xf32, #tpu.memory_space<vmem>>, vector<1x4x512xf32>
    %37 = vector.shape_cast %36 : vector<1x4x512xf32> to vector<4x512xf32>
    %38 = arith.truncf %35 : vector<4x128xf32> to vector<4x128xbf16>
    %c0_14 = arith.constant 0 : index
    %c0_15 = arith.constant 0 : index
    %39 = vector.load %arg2[%c0_14, %c0_15] : memref<128x512xbf16, #tpu.memory_space<vmem>>, vector<128x512xbf16>
    %cst_16 = arith.constant dense<0.000000e+00> : vector<4x512xf32>
    %40 = tpu.matmul %38, %39, %cst_16 {dimension_numbers = #tpu.dot_dimension_numbers<[1], [0], [0], [1], [0, 0, 1, 1], [], []>} : vector<4x128xbf16>, vector<128x512xbf16>, vector<4x512xf32> -> vector<4x512xf32>
    %41 = arith.addf %37, %40 : vector<4x512xf32>
    %42 = vector.extract_strided_slice %41 {offsets = [0, 0], sizes = [4, 128], strides = [1, 1]} : vector<4x512xf32> to vector<4x128xf32>
    %43 = arith.negf %42 : vector<4x128xf32>
    %44 = math.exp %43 : vector<4x128xf32>
    %cst_17 = arith.constant 1.000000e+00 : f32
    %45 = vector.broadcast %cst_17 : f32 to vector<4x128xf32>
    %46 = arith.addf %45, %44 : vector<4x128xf32>
    %47 = arith.divf %45, %46 : vector<4x128xf32>
    %48 = vector.extract_strided_slice %41 {offsets = [0, 128], sizes = [4, 128], strides = [1, 1]} : vector<4x512xf32> to vector<4x128xf32>
    %49 = arith.negf %48 : vector<4x128xf32>
    %50 = math.exp %49 : vector<4x128xf32>
    %cst_18 = arith.constant 1.000000e+00 : f32
    %51 = vector.broadcast %cst_18 : f32 to vector<4x128xf32>
    %52 = arith.addf %51, %50 : vector<4x128xf32>
    %53 = arith.divf %51, %52 : vector<4x128xf32>
    %54 = vector.extract_strided_slice %41 {offsets = [0, 256], sizes = [4, 128], strides = [1, 1]} : vector<4x512xf32> to vector<4x128xf32>
    %55 = math.tanh %54 : vector<4x128xf32>
    %56 = vector.extract_strided_slice %41 {offsets = [0, 384], sizes = [4, 128], strides = [1, 1]} : vector<4x512xf32> to vector<4x128xf32>
    %57 = arith.negf %56 : vector<4x128xf32>
    %58 = math.exp %57 : vector<4x128xf32>
    %cst_19 = arith.constant 1.000000e+00 : f32
    %59 = vector.broadcast %cst_19 : f32 to vector<4x128xf32>
    %60 = arith.addf %59, %58 : vector<4x128xf32>
    %61 = arith.divf %59, %60 : vector<4x128xf32>
    %62 = arith.mulf %53, %33 : vector<4x128xf32>
    %63 = arith.mulf %47, %55 : vector<4x128xf32>
    %64 = arith.addf %62, %63 : vector<4x128xf32>
    %65 = math.tanh %64 : vector<4x128xf32>
    %66 = arith.mulf %61, %65 : vector<4x128xf32>
    %c2 = arith.constant 2 : index
    %c0_20 = arith.constant 0 : index
    %c0_21 = arith.constant 0 : index
    %67 = vector.load %arg1[%c2, %c0_20, %c0_21] : memref<8x4x512xf32, #tpu.memory_space<vmem>>, vector<1x4x512xf32>
    %68 = vector.shape_cast %67 : vector<1x4x512xf32> to vector<4x512xf32>
    %69 = arith.truncf %66 : vector<4x128xf32> to vector<4x128xbf16>
    %c0_22 = arith.constant 0 : index
    %c0_23 = arith.constant 0 : index
    %70 = vector.load %arg2[%c0_22, %c0_23] : memref<128x512xbf16, #tpu.memory_space<vmem>>, vector<128x512xbf16>
    %cst_24 = arith.constant dense<0.000000e+00> : vector<4x512xf32>
    %71 = tpu.matmul %69, %70, %cst_24 {dimension_numbers = #tpu.dot_dimension_numbers<[1], [0], [0], [1], [0, 0, 1, 1], [], []>} : vector<4x128xbf16>, vector<128x512xbf16>, vector<4x512xf32> -> vector<4x512xf32>
    %72 = arith.addf %68, %71 : vector<4x512xf32>
    %73 = vector.extract_strided_slice %72 {offsets = [0, 0], sizes = [4, 128], strides = [1, 1]} : vector<4x512xf32> to vector<4x128xf32>
    %74 = arith.negf %73 : vector<4x128xf32>
    %75 = math.exp %74 : vector<4x128xf32>
    %cst_25 = arith.constant 1.000000e+00 : f32
    %76 = vector.broadcast %cst_25 : f32 to vector<4x128xf32>
    %77 = arith.addf %76, %75 : vector<4x128xf32>
    %78 = arith.divf %76, %77 : vector<4x128xf32>
    %79 = vector.extract_strided_slice %72 {offsets = [0, 128], sizes = [4, 128], strides = [1, 1]} : vector<4x512xf32> to vector<4x128xf32>
    %80 = arith.negf %79 : vector<4x128xf32>
    %81 = math.exp %80 : vector<4x128xf32>
    %cst_26 = arith.constant 1.000000e+00 : f32
    %82 = vector.broadcast %cst_26 : f32 to vector<4x128xf32>
    %83 = arith.addf %82, %81 : vector<4x128xf32>
    %84 = arith.divf %82, %83 : vector<4x128xf32>
    %85 = vector.extract_strided_slice %72 {offsets = [0, 256], sizes = [4, 128], strides = [1, 1]} : vector<4x512xf32> to vector<4x128xf32>
    %86 = math.tanh %85 : vector<4x128xf32>
    %87 = vector.extract_strided_slice %72 {offsets = [0, 384], sizes = [4, 128], strides = [1, 1]} : vector<4x512xf32> to vector<4x128xf32>
    %88 = arith.negf %87 : vector<4x128xf32>
    %89 = math.exp %88 : vector<4x128xf32>
    %cst_27 = arith.constant 1.000000e+00 : f32
    %90 = vector.broadcast %cst_27 : f32 to vector<4x128xf32>
    %91 = arith.addf %90, %89 : vector<4x128xf32>
    %92 = arith.divf %90, %91 : vector<4x128xf32>
    %93 = arith.mulf %84, %64 : vector<4x128xf32>
    %94 = arith.mulf %78, %86 : vector<4x128xf32>
    %95 = arith.addf %93, %94 : vector<4x128xf32>
    %96 = math.tanh %95 : vector<4x128xf32>
    %97 = arith.mulf %92, %96 : vector<4x128xf32>
    %c3 = arith.constant 3 : index
    %c0_28 = arith.constant 0 : index
    %c0_29 = arith.constant 0 : index
    %98 = vector.load %arg1[%c3, %c0_28, %c0_29] : memref<8x4x512xf32, #tpu.memory_space<vmem>>, vector<1x4x512xf32>
    %99 = vector.shape_cast %98 : vector<1x4x512xf32> to vector<4x512xf32>
    %100 = arith.truncf %97 : vector<4x128xf32> to vector<4x128xbf16>
    %c0_30 = arith.constant 0 : index
    %c0_31 = arith.constant 0 : index
    %101 = vector.load %arg2[%c0_30, %c0_31] : memref<128x512xbf16, #tpu.memory_space<vmem>>, vector<128x512xbf16>
    %cst_32 = arith.constant dense<0.000000e+00> : vector<4x512xf32>
    %102 = tpu.matmul %100, %101, %cst_32 {dimension_numbers = #tpu.dot_dimension_numbers<[1], [0], [0], [1], [0, 0, 1, 1], [], []>} : vector<4x128xbf16>, vector<128x512xbf16>, vector<4x512xf32> -> vector<4x512xf32>
    %103 = arith.addf %99, %102 : vector<4x512xf32>
    %104 = vector.extract_strided_slice %103 {offsets = [0, 0], sizes = [4, 128], strides = [1, 1]} : vector<4x512xf32> to vector<4x128xf32>
    %105 = arith.negf %104 : vector<4x128xf32>
    %106 = math.exp %105 : vector<4x128xf32>
    %cst_33 = arith.constant 1.000000e+00 : f32
    %107 = vector.broadcast %cst_33 : f32 to vector<4x128xf32>
    %108 = arith.addf %107, %106 : vector<4x128xf32>
    %109 = arith.divf %107, %108 : vector<4x128xf32>
    %110 = vector.extract_strided_slice %103 {offsets = [0, 128], sizes = [4, 128], strides = [1, 1]} : vector<4x512xf32> to vector<4x128xf32>
    %111 = arith.negf %110 : vector<4x128xf32>
    %112 = math.exp %111 : vector<4x128xf32>
    %cst_34 = arith.constant 1.000000e+00 : f32
    %113 = vector.broadcast %cst_34 : f32 to vector<4x128xf32>
    %114 = arith.addf %113, %112 : vector<4x128xf32>
    %115 = arith.divf %113, %114 : vector<4x128xf32>
    %116 = vector.extract_strided_slice %103 {offsets = [0, 256], sizes = [4, 128], strides = [1, 1]} : vector<4x512xf32> to vector<4x128xf32>
    %117 = math.tanh %116 : vector<4x128xf32>
    %118 = vector.extract_strided_slice %103 {offsets = [0, 384], sizes = [4, 128], strides = [1, 1]} : vector<4x512xf32> to vector<4x128xf32>
    %119 = arith.negf %118 : vector<4x128xf32>
    %120 = math.exp %119 : vector<4x128xf32>
    %cst_35 = arith.constant 1.000000e+00 : f32
    %121 = vector.broadcast %cst_35 : f32 to vector<4x128xf32>
    %122 = arith.addf %121, %120 : vector<4x128xf32>
    %123 = arith.divf %121, %122 : vector<4x128xf32>
    %124 = arith.mulf %115, %95 : vector<4x128xf32>
    %125 = arith.mulf %109, %117 : vector<4x128xf32>
    %126 = arith.addf %124, %125 : vector<4x128xf32>
    %127 = math.tanh %126 : vector<4x128xf32>
    %128 = arith.mulf %123, %127 : vector<4x128xf32>
    %c4 = arith.constant 4 : index
    %c0_36 = arith.constant 0 : index
    %c0_37 = arith.constant 0 : index
    %129 = vector.load %arg1[%c4, %c0_36, %c0_37] : memref<8x4x512xf32, #tpu.memory_space<vmem>>, vector<1x4x512xf32>
    %130 = vector.shape_cast %129 : vector<1x4x512xf32> to vector<4x512xf32>
    %131 = arith.truncf %128 : vector<4x128xf32> to vector<4x128xbf16>
    %c0_38 = arith.constant 0 : index
    %c0_39 = arith.constant 0 : index
    %132 = vector.load %arg2[%c0_38, %c0_39] : memref<128x512xbf16, #tpu.memory_space<vmem>>, vector<128x512xbf16>
    %cst_40 = arith.constant dense<0.000000e+00> : vector<4x512xf32>
    %133 = tpu.matmul %131, %132, %cst_40 {dimension_numbers = #tpu.dot_dimension_numbers<[1], [0], [0], [1], [0, 0, 1, 1], [], []>} : vector<4x128xbf16>, vector<128x512xbf16>, vector<4x512xf32> -> vector<4x512xf32>
    %134 = arith.addf %130, %133 : vector<4x512xf32>
    %135 = vector.extract_strided_slice %134 {offsets = [0, 0], sizes = [4, 128], strides = [1, 1]} : vector<4x512xf32> to vector<4x128xf32>
    %136 = arith.negf %135 : vector<4x128xf32>
    %137 = math.exp %136 : vector<4x128xf32>
    %cst_41 = arith.constant 1.000000e+00 : f32
    %138 = vector.broadcast %cst_41 : f32 to vector<4x128xf32>
    %139 = arith.addf %138, %137 : vector<4x128xf32>
    %140 = arith.divf %138, %139 : vector<4x128xf32>
    %141 = vector.extract_strided_slice %134 {offsets = [0, 128], sizes = [4, 128], strides = [1, 1]} : vector<4x512xf32> to vector<4x128xf32>
    %142 = arith.negf %141 : vector<4x128xf32>
    %143 = math.exp %142 : vector<4x128xf32>
    %cst_42 = arith.constant 1.000000e+00 : f32
    %144 = vector.broadcast %cst_42 : f32 to vector<4x128xf32>
    %145 = arith.addf %144, %143 : vector<4x128xf32>
    %146 = arith.divf %144, %145 : vector<4x128xf32>
    %147 = vector.extract_strided_slice %134 {offsets = [0, 256], sizes = [4, 128], strides = [1, 1]} : vector<4x512xf32> to vector<4x128xf32>
    %148 = math.tanh %147 : vector<4x128xf32>
    %149 = vector.extract_strided_slice %134 {offsets = [0, 384], sizes = [4, 128], strides = [1, 1]} : vector<4x512xf32> to vector<4x128xf32>
    %150 = arith.negf %149 : vector<4x128xf32>
    %151 = math.exp %150 : vector<4x128xf32>
    %cst_43 = arith.constant 1.000000e+00 : f32
    %152 = vector.broadcast %cst_43 : f32 to vector<4x128xf32>
    %153 = arith.addf %152, %151 : vector<4x128xf32>
    %154 = arith.divf %152, %153 : vector<4x128xf32>
    %155 = arith.mulf %146, %126 : vector<4x128xf32>
    %156 = arith.mulf %140, %148 : vector<4x128xf32>
    %157 = arith.addf %155, %156 : vector<4x128xf32>
    %158 = math.tanh %157 : vector<4x128xf32>
    %159 = arith.mulf %154, %158 : vector<4x128xf32>
    %c5 = arith.constant 5 : index
    %c0_44 = arith.constant 0 : index
    %c0_45 = arith.constant 0 : index
    %160 = vector.load %arg1[%c5, %c0_44, %c0_45] : memref<8x4x512xf32, #tpu.memory_space<vmem>>, vector<1x4x512xf32>
    %161 = vector.shape_cast %160 : vector<1x4x512xf32> to vector<4x512xf32>
    %162 = arith.truncf %159 : vector<4x128xf32> to vector<4x128xbf16>
    %c0_46 = arith.constant 0 : index
    %c0_47 = arith.constant 0 : index
    %163 = vector.load %arg2[%c0_46, %c0_47] : memref<128x512xbf16, #tpu.memory_space<vmem>>, vector<128x512xbf16>
    %cst_48 = arith.constant dense<0.000000e+00> : vector<4x512xf32>
    %164 = tpu.matmul %162, %163, %cst_48 {dimension_numbers = #tpu.dot_dimension_numbers<[1], [0], [0], [1], [0, 0, 1, 1], [], []>} : vector<4x128xbf16>, vector<128x512xbf16>, vector<4x512xf32> -> vector<4x512xf32>
    %165 = arith.addf %161, %164 : vector<4x512xf32>
    %166 = vector.extract_strided_slice %165 {offsets = [0, 0], sizes = [4, 128], strides = [1, 1]} : vector<4x512xf32> to vector<4x128xf32>
    %167 = arith.negf %166 : vector<4x128xf32>
    %168 = math.exp %167 : vector<4x128xf32>
    %cst_49 = arith.constant 1.000000e+00 : f32
    %169 = vector.broadcast %cst_49 : f32 to vector<4x128xf32>
    %170 = arith.addf %169, %168 : vector<4x128xf32>
    %171 = arith.divf %169, %170 : vector<4x128xf32>
    %172 = vector.extract_strided_slice %165 {offsets = [0, 128], sizes = [4, 128], strides = [1, 1]} : vector<4x512xf32> to vector<4x128xf32>
    %173 = arith.negf %172 : vector<4x128xf32>
    %174 = math.exp %173 : vector<4x128xf32>
    %cst_50 = arith.constant 1.000000e+00 : f32
    %175 = vector.broadcast %cst_50 : f32 to vector<4x128xf32>
    %176 = arith.addf %175, %174 : vector<4x128xf32>
    %177 = arith.divf %175, %176 : vector<4x128xf32>
    %178 = vector.extract_strided_slice %165 {offsets = [0, 256], sizes = [4, 128], strides = [1, 1]} : vector<4x512xf32> to vector<4x128xf32>
    %179 = math.tanh %178 : vector<4x128xf32>
    %180 = vector.extract_strided_slice %165 {offsets = [0, 384], sizes = [4, 128], strides = [1, 1]} : vector<4x512xf32> to vector<4x128xf32>
    %181 = arith.negf %180 : vector<4x128xf32>
    %182 = math.exp %181 : vector<4x128xf32>
    %cst_51 = arith.constant 1.000000e+00 : f32
    %183 = vector.broadcast %cst_51 : f32 to vector<4x128xf32>
    %184 = arith.addf %183, %182 : vector<4x128xf32>
    %185 = arith.divf %183, %184 : vector<4x128xf32>
    %186 = arith.mulf %177, %157 : vector<4x128xf32>
    %187 = arith.mulf %171, %179 : vector<4x128xf32>
    %188 = arith.addf %186, %187 : vector<4x128xf32>
    %189 = math.tanh %188 : vector<4x128xf32>
    %190 = arith.mulf %185, %189 : vector<4x128xf32>
    %c6 = arith.constant 6 : index
    %c0_52 = arith.constant 0 : index
    %c0_53 = arith.constant 0 : index
    %191 = vector.load %arg1[%c6, %c0_52, %c0_53] : memref<8x4x512xf32, #tpu.memory_space<vmem>>, vector<1x4x512xf32>
    %192 = vector.shape_cast %191 : vector<1x4x512xf32> to vector<4x512xf32>
    %193 = arith.truncf %190 : vector<4x128xf32> to vector<4x128xbf16>
    %c0_54 = arith.constant 0 : index
    %c0_55 = arith.constant 0 : index
    %194 = vector.load %arg2[%c0_54, %c0_55] : memref<128x512xbf16, #tpu.memory_space<vmem>>, vector<128x512xbf16>
    %cst_56 = arith.constant dense<0.000000e+00> : vector<4x512xf32>
    %195 = tpu.matmul %193, %194, %cst_56 {dimension_numbers = #tpu.dot_dimension_numbers<[1], [0], [0], [1], [0, 0, 1, 1], [], []>} : vector<4x128xbf16>, vector<128x512xbf16>, vector<4x512xf32> -> vector<4x512xf32>
    %196 = arith.addf %192, %195 : vector<4x512xf32>
    %197 = vector.extract_strided_slice %196 {offsets = [0, 0], sizes = [4, 128], strides = [1, 1]} : vector<4x512xf32> to vector<4x128xf32>
    %198 = arith.negf %197 : vector<4x128xf32>
    %199 = math.exp %198 : vector<4x128xf32>
    %cst_57 = arith.constant 1.000000e+00 : f32
    %200 = vector.broadcast %cst_57 : f32 to vector<4x128xf32>
    %201 = arith.addf %200, %199 : vector<4x128xf32>
    %202 = arith.divf %200, %201 : vector<4x128xf32>
    %203 = vector.extract_strided_slice %196 {offsets = [0, 128], sizes = [4, 128], strides = [1, 1]} : vector<4x512xf32> to vector<4x128xf32>
    %204 = arith.negf %203 : vector<4x128xf32>
    %205 = math.exp %204 : vector<4x128xf32>
    %cst_58 = arith.constant 1.000000e+00 : f32
    %206 = vector.broadcast %cst_58 : f32 to vector<4x128xf32>
    %207 = arith.addf %206, %205 : vector<4x128xf32>
    %208 = arith.divf %206, %207 : vector<4x128xf32>
    %209 = vector.extract_strided_slice %196 {offsets = [0, 256], sizes = [4, 128], strides = [1, 1]} : vector<4x512xf32> to vector<4x128xf32>
    %210 = math.tanh %209 : vector<4x128xf32>
    %211 = vector.extract_strided_slice %196 {offsets = [0, 384], sizes = [4, 128], strides = [1, 1]} : vector<4x512xf32> to vector<4x128xf32>
    %212 = arith.negf %211 : vector<4x128xf32>
    %213 = math.exp %212 : vector<4x128xf32>
    %cst_59 = arith.constant 1.000000e+00 : f32
    %214 = vector.broadcast %cst_59 : f32 to vector<4x128xf32>
    %215 = arith.addf %214, %213 : vector<4x128xf32>
    %216 = arith.divf %214, %215 : vector<4x128xf32>
    %217 = arith.mulf %208, %188 : vector<4x128xf32>
    %218 = arith.mulf %202, %210 : vector<4x128xf32>
    %219 = arith.addf %217, %218 : vector<4x128xf32>
    %220 = math.tanh %219 : vector<4x128xf32>
    %221 = arith.mulf %216, %220 : vector<4x128xf32>
    %c7 = arith.constant 7 : index
    %c0_60 = arith.constant 0 : index
    %c0_61 = arith.constant 0 : index
    %222 = vector.load %arg1[%c7, %c0_60, %c0_61] : memref<8x4x512xf32, #tpu.memory_space<vmem>>, vector<1x4x512xf32>
    %223 = vector.shape_cast %222 : vector<1x4x512xf32> to vector<4x512xf32>
    %224 = arith.truncf %221 : vector<4x128xf32> to vector<4x128xbf16>
    %c0_62 = arith.constant 0 : index
    %c0_63 = arith.constant 0 : index
    %225 = vector.load %arg2[%c0_62, %c0_63] : memref<128x512xbf16, #tpu.memory_space<vmem>>, vector<128x512xbf16>
    %cst_64 = arith.constant dense<0.000000e+00> : vector<4x512xf32>
    %226 = tpu.matmul %224, %225, %cst_64 {dimension_numbers = #tpu.dot_dimension_numbers<[1], [0], [0], [1], [0, 0, 1, 1], [], []>} : vector<4x128xbf16>, vector<128x512xbf16>, vector<4x512xf32> -> vector<4x512xf32>
    %227 = arith.addf %223, %226 : vector<4x512xf32>
    %228 = vector.extract_strided_slice %227 {offsets = [0, 0], sizes = [4, 128], strides = [1, 1]} : vector<4x512xf32> to vector<4x128xf32>
    %229 = arith.negf %228 : vector<4x128xf32>
    %230 = math.exp %229 : vector<4x128xf32>
    %cst_65 = arith.constant 1.000000e+00 : f32
    %231 = vector.broadcast %cst_65 : f32 to vector<4x128xf32>
    %232 = arith.addf %231, %230 : vector<4x128xf32>
    %233 = arith.divf %231, %232 : vector<4x128xf32>
    %234 = vector.extract_strided_slice %227 {offsets = [0, 128], sizes = [4, 128], strides = [1, 1]} : vector<4x512xf32> to vector<4x128xf32>
    %235 = arith.negf %234 : vector<4x128xf32>
    %236 = math.exp %235 : vector<4x128xf32>
    %cst_66 = arith.constant 1.000000e+00 : f32
    %237 = vector.broadcast %cst_66 : f32 to vector<4x128xf32>
    %238 = arith.addf %237, %236 : vector<4x128xf32>
    %239 = arith.divf %237, %238 : vector<4x128xf32>
    %240 = vector.extract_strided_slice %227 {offsets = [0, 256], sizes = [4, 128], strides = [1, 1]} : vector<4x512xf32> to vector<4x128xf32>
    %241 = math.tanh %240 : vector<4x128xf32>
    %242 = vector.extract_strided_slice %227 {offsets = [0, 384], sizes = [4, 128], strides = [1, 1]} : vector<4x512xf32> to vector<4x128xf32>
    %243 = arith.negf %242 : vector<4x128xf32>
    %244 = math.exp %243 : vector<4x128xf32>
    %cst_67 = arith.constant 1.000000e+00 : f32
    %245 = vector.broadcast %cst_67 : f32 to vector<4x128xf32>
    %246 = arith.addf %245, %244 : vector<4x128xf32>
    %247 = arith.divf %245, %246 : vector<4x128xf32>
    %248 = arith.mulf %239, %219 : vector<4x128xf32>
    %249 = arith.mulf %233, %241 : vector<4x128xf32>
    %250 = arith.addf %248, %249 : vector<4x128xf32>
    %251 = math.tanh %250 : vector<4x128xf32>
    %252 = arith.mulf %247, %251 : vector<4x128xf32>
    %c0_68 = arith.constant 0 : index
    %c0_69 = arith.constant 0 : index
    %253 = vector.load %arg8[%c0_68, %c0_69] : memref<4x128xf32, #tpu.memory_space<vmem>>, vector<4x128xf32>
    tpu.vector_store %arg8[%c0_68, %c0_69], %252 {strides = array<i32>} : memref<4x128xf32, #tpu.memory_space<vmem>>, vector<4x128xf32>,
    %c0_70 = arith.constant 0 : index
    %c0_71 = arith.constant 0 : index
    %254 = vector.load %arg9[%c0_70, %c0_71] : memref<4x128xf32, #tpu.memory_space<vmem>>, vector<4x128xf32>
    tpu.vector_store %arg9[%c0_70, %c0_71], %250 {strides = array<i32>} : memref<4x128xf32, #tpu.memory_space<vmem>>, vector<4x128xf32>,
    %c0_i32_72 = arith.constant 0 : i32
    %255 = arith.cmpi eq, %arg0, %c0_i32_72 : i32
    %256 = arith.extui %255 : i1 to i32
    %c0_i32_73 = arith.constant 0 : i32
    %257 = arith.cmpi ne, %256, %c0_i32_73 : i32
    scf.if %257 {
      %cst_74 = arith.constant dense<0.000000e+00> : vector<128xf32>
      %258 = vector.multi_reduction <add>, %252, %cst_74 [0] : vector<4x128xf32> to vector<128xf32>
      %259 = vector.shape_cast %258 : vector<128xf32> to vector<1x128xf32>
      %cst_75 = arith.constant 4.000000e+00 : f32
      %260 = vector.broadcast %cst_75 : f32 to vector<1x128xf32>
      %261 = arith.divf %259, %260 : vector<1x128xf32>
      %262 = vector.broadcast %261 : vector<1x128xf32> to vector<4x128xf32>
      %263 = arith.subf %252, %262 : vector<4x128xf32>
      %264 = arith.mulf %263, %263 : vector<4x128xf32>
      %cst_76 = arith.constant dense<0.000000e+00> : vector<128xf32>
      %265 = vector.multi_reduction <add>, %264, %cst_76 [0] : vector<4x128xf32> to vector<128xf32>
      %266 = vector.shape_cast %265 : vector<128xf32> to vector<1x128xf32>
      %cst_77 = arith.constant 4.000000e+00 : f32
      %267 = vector.broadcast %cst_77 : f32 to vector<1x128xf32>
      %268 = arith.divf %266, %267 : vector<1x128xf32>
      %269 = vector.broadcast %261 : vector<1x128xf32> to vector<4x128xf32>
      %270 = arith.subf %252, %269 : vector<4x128xf32>
      %cst_78 = arith.constant 9.99999974E-6 : f32
      %271 = vector.broadcast %cst_78 : f32 to vector<1x128xf32>
      %272 = arith.addf %268, %271 : vector<1x128xf32>
      %273 = math.rsqrt %272 : vector<1x128xf32>
      %274 = vector.broadcast %273 : vector<1x128xf32> to vector<4x128xf32>
      %275 = arith.mulf %270, %274 : vector<4x128xf32>
      %c0_79 = arith.constant 0 : index
      %c0_80 = arith.constant 0 : index
      %276 = vector.load %arg3[%c0_79, %c0_80] : memref<1x128xf32, #tpu.memory_space<vmem>>, vector<1x128xf32>
      %277 = vector.broadcast %276 : vector<1x128xf32> to vector<4x128xf32>
      %278 = arith.mulf %275, %277 : vector<4x128xf32>
      %c0_81 = arith.constant 0 : index
      %c0_82 = arith.constant 0 : index
      %279 = vector.load %arg4[%c0_81, %c0_82] : memref<1x128xf32, #tpu.memory_space<vmem>>, vector<1x128xf32>
      %280 = vector.broadcast %279 : vector<1x128xf32> to vector<4x128xf32>
      %281 = arith.addf %278, %280 : vector<4x128xf32>
      %282 = arith.truncf %281 : vector<4x128xf32> to vector<4x128xbf16>
      %c0_83 = arith.constant 0 : index
      %c0_84 = arith.constant 0 : index
      %283 = vector.load %arg5[%c0_83, %c0_84] : memref<128x128xbf16, #tpu.memory_space<vmem>>, vector<128x128xbf16>
      %cst_85 = arith.constant dense<0.000000e+00> : vector<4x128xf32>
      %284 = tpu.matmul %282, %283, %cst_85 {dimension_numbers = #tpu.dot_dimension_numbers<[1], [0], [0], [1], [0, 0, 1, 1], [], []>} : vector<4x128xbf16>, vector<128x128xbf16>, vector<4x128xf32> -> vector<4x128xf32>
      %c0_86 = arith.constant 0 : index
      %c0_87 = arith.constant 0 : index
      %285 = vector.load %arg6[%c0_86, %c0_87] : memref<1x128xf32, #tpu.memory_space<vmem>>, vector<1x128xf32>
      %286 = vector.broadcast %285 : vector<1x128xf32> to vector<4x128xf32>
      %287 = arith.addf %284, %286 : vector<4x128xf32>
      %288 = arith.negf %287 : vector<4x128xf32>
      %289 = math.exp %288 : vector<4x128xf32>
      %cst_88 = arith.constant 1.000000e+00 : f32
      %290 = vector.broadcast %cst_88 : f32 to vector<4x128xf32>
      %291 = arith.addf %290, %289 : vector<4x128xf32>
      %292 = arith.divf %290, %291 : vector<4x128xf32>
      %c0_89 = arith.constant 0 : index
      %c0_90 = arith.constant 0 : index
      %293 = vector.load %arg7[%c0_89, %c0_90] : memref<4x128xf32, #tpu.memory_space<vmem>>, vector<4x128xf32>
      tpu.vector_store %arg7[%c0_89, %c0_90], %292 {strides = array<i32>} : memref<4x128xf32, #tpu.memory_space<vmem>>, vector<4x128xf32>,
    } else {
    }
    return
  }
  func.func @transform_0(%arg0: i32) -> (i32, i32, i32) {
    %c0_i32 = arith.constant 0 : i32
    %c0_i32_0 = arith.constant 0 : i32
    %c0_i32_1 = arith.constant 0 : i32
    return %arg0, %c0_i32, %c0_i32_0 : i32, i32, i32
  }
  func.func @transform_1(%arg0: i32) -> (i32, i32) {
    %c0_i32 = arith.constant 0 : i32
    %c0_i32_0 = arith.constant 0 : i32
    %c0_i32_1 = arith.constant 0 : i32
    return %c0_i32, %c0_i32_0 : i32, i32
  }
  func.func @transform_2(%arg0: i32) -> (i32, i32) {
    %c0_i32 = arith.constant 0 : i32
    %c0_i32_0 = arith.constant 0 : i32
    %c0_i32_1 = arith.constant 0 : i32
    return %c0_i32, %c0_i32_0 : i32, i32
  }
  func.func @transform_3(%arg0: i32) -> (i32, i32) {
    %c0_i32 = arith.constant 0 : i32
    %c0_i32_0 = arith.constant 0 : i32
    %c0_i32_1 = arith.constant 0 : i32
    return %c0_i32, %c0_i32_0 : i32, i32
  }
  func.func @transform_4(%arg0: i32) -> (i32, i32) {
    %c0_i32 = arith.constant 0 : i32
    %c0_i32_0 = arith.constant 0 : i32
    %c0_i32_1 = arith.constant 0 : i32
    return %c0_i32, %c0_i32_0 : i32, i32
  }
  func.func @transform_5(%arg0: i32) -> (i32, i32) {
    %c0_i32 = arith.constant 0 : i32
    %c0_i32_0 = arith.constant 0 : i32
    %c0_i32_1 = arith.constant 0 : i32
    return %c0_i32, %c0_i32_0 : i32, i32
  }
  func.func @transform_6(%arg0: i32) -> (i32, i32) {
    %c0_i32 = arith.constant 0 : i32
    %c0_i32_0 = arith.constant 0 : i32
    %c0_i32_1 = arith.constant 0 : i32
    return %c0_i32, %c0_i32_0 : i32, i32
  }
}

</mosaic_0001>

<llo_original>
// kernel: piano_roll_lstm_forward.2
$region0: #{piano_roll_lstm_forward.2}
  #allocation0 [shape = 'u32[]', space=smem, size = 0x4, offset = 0x4, fixed_abs, tag = 'smem constant byte address 0x4 - core index']
  #allocation1 [shape = 'u32[144,128]{1,0:T(1,128)}', space=vmem, size = 0x12000, scoped, tag = 'internal scratch']
  %s0 = inlined_call_operand.vmem [shape: f32[4,8,128], index: 0, kind: input, shape index: {}]
  %s1 = inlined_call_operand.vmem [shape: bf16[128,512], index: 1, kind: input, shape index: {}]
  %s2 = inlined_call_operand.vmem [shape: f32[1,512], index: 2, kind: input, shape index: {}]
  %s3 = inlined_call_operand.vmem [shape: f32[8,2048], index: 3, kind: output, shape index: {}]
  %s4 = sld [smem:[#allocation0]]
  $region45: #{piano_roll_lstm_forward.2} parent=0
    _
  %s6 = ssub.s32 1, %s4
  %s7 = scalar_select 0, %s6, %s4
  loop: start=0, step=1, limit=6
  $region2: #{piano_roll_lstm_forward.2} parent=0 // loop_pre_header
    _
  $region3: #{piano_roll_lstm_forward.2} parent=0 // loop_header
    %s9 = sphi 0, %s13
    %p10 = scmp.ge.s32.totalorder %s9, 6
    %s16 = sphi 0, %s28
    %s17 = sphi 0, %s24
    %s18 = sphi 0, %s16
    %s19 = sphi 0, %s17
    %s20 = sphi 0, %s18
    %s21 = sphi 0, %s19
    %s33 = sphi 0, %s35
    %s36 = sphi 0, %s33
    %s37 = sphi 0, %s36
    %s53 = sphi 0, %s37
    %s57 = sphi 0, %s57
    %s59 = sphi 0, %s57
    %s60 = sphi 0, %s59
    %s74 = sphi 0, %s60
    %s78 = sphi 0, %s78
    %s80 = sphi 0, %s78
    %s81 = sphi 0, %s80
    %s95 = sphi 0, %s81
    %s103 = sphi 0, %s105
    %s106 = sphi 0, %s103
    %s107 = sphi 0, %s106
    %s123 = sphi 0, %s107
  $region4: #{piano_roll_lstm_forward.2} parent=0 // loop_header_branch
    %12 = sbr.rel (%p10) target = $region8
  $region5: #{piano_roll_lstm_forward.2} parent=0 // loop_body
    %s14 = ssub.s32 %s9, 1
    %s15 = ssub.s32 %s9, 2
    %s22 = sadd.s32 1, %s17
    %p23 = scmp.ge.s32.totalorder %s22, 4
    %s24 = scalar_select %p23, 0, %s22
    %s25 = sadd.s32 1, %s16
    %s26 = scalar_select %p23, %s25, %s16
    %p27 = scmp.ge.s32.totalorder %s26, 1
    %s28 = scalar_select %p27, 0, %s26
    %s29 = ssub.s32 %s17, %s24
    %s30 = ssub.s32 %s16, %s28
    %s31 = sor.u32 %s29, %s30
    %p32 = scmp.eq.s32.totalorder %s31, 0
    %s34 = sadd.s32 %s33, 1
    %s35 = scalar_select %p32, %s33, %s34
    %p38 = pneg %p32
    %p39 = scmp.eq.s32.totalorder %s9, 3
    %p40 = por %p38, %p39
    %p41 = scmp.ne.s32.totalorder %s33, %s36
    %p42 = scmp.eq.s32.totalorder %s9, 0
    %p43 = por %p41, %p42
    %p44 = scmp.ne.s32.totalorder %s33, %s36
    %p45 = scmp.eq.s32.totalorder %s14, 3
    %p46 = por %p44, %p45
    %p47 = scmp.ne.s32.totalorder %s36, %s37
    %p48 = scmp.eq.s32.totalorder %s14, 0
    %p49 = por %p47, %p48
    %p50 = scmp.ne.s32.totalorder %s36, %s37
    %p51 = scmp.eq.s32.totalorder %s15, 3
    %p52 = por %p50, %p51
    %p54 = scmp.ne.s32.totalorder %s37, %s53
    %p55 = scmp.eq.s32.totalorder %s15, 0
    %p56 = por %p54, %p55
    %s58 = sadd.s32 %s57, 1
    %p61 = scmp.eq.s32.totalorder %s9, 3
    %p62 = scmp.ne.s32.totalorder %s57, %s59
    %p63 = scmp.eq.s32.totalorder %s9, 0
    %p64 = por %p62, %p63
    %p65 = scmp.ne.s32.totalorder %s57, %s59
    %p66 = scmp.eq.s32.totalorder %s14, 3
    %p67 = por %p65, %p66
    %p68 = scmp.ne.s32.totalorder %s59, %s60
    %p69 = scmp.eq.s32.totalorder %s14, 0
    %p70 = por %p68, %p69
    %p71 = scmp.ne.s32.totalorder %s59, %s60
    %p72 = scmp.eq.s32.totalorder %s15, 3
    %p73 = por %p71, %p72
    %p75 = scmp.ne.s32.totalorder %s60, %s74
    %p76 = scmp.eq.s32.totalorder %s15, 0
    %p77 = por %p75, %p76
    %s79 = sadd.s32 %s78, 1
    %p82 = scmp.eq.s32.totalorder %s9, 3
    %p83 = scmp.ne.s32.totalorder %s78, %s80
    %p84 = scmp.eq.s32.totalorder %s9, 0
    %p85 = por %p83, %p84
    %p86 = scmp.ne.s32.totalorder %s78, %s80
    %p87 = scmp.eq.s32.totalorder %s14, 3
    %p88 = por %p86, %p87
    %p89 = scmp.ne.s32.totalorder %s80, %s81
    %p90 = scmp.eq.s32.totalorder %s14, 0
    %p91 = por %p89, %p90
    %p92 = scmp.ne.s32.totalorder %s80, %s81
    %p93 = scmp.eq.s32.totalorder %s15, 3
    %p94 = por %p92, %p93
    %p96 = scmp.ne.s32.totalorder %s81, %s95
    %p97 = scmp.eq.s32.totalorder %s15, 0
    %p98 = por %p96, %p97
    %s99 = ssub.s32 %s16, %s28
    %s100 = ssub.s32 %s17, %s24
    %s101 = sor.u32 %s99, %s100
    %p102 = scmp.eq.s32.totalorder %s101, 0
    %s104 = sadd.s32 %s103, 1
    %s105 = scalar_select %p102, %s103, %s104
    %p108 = pneg %p102
    %p109 = scmp.eq.s32.totalorder %s9, 3
    %p110 = por %p108, %p109
    %p111 = scmp.ne.s32.totalorder %s103, %s106
    %p112 = scmp.eq.s32.totalorder %s9, 0
    %p113 = por %p111, %p112
    %p114 = scmp.ne.s32.totalorder %s103, %s106
    %p115 = scmp.eq.s32.totalorder %s14, 3
    %p116 = por %p114, %p115
    %p117 = scmp.ne.s32.totalorder %s106, %s107
    %p118 = scmp.eq.s32.totalorder %s14, 0
    %p119 = por %p117, %p118
    %p120 = scmp.ne.s32.totalorder %s106, %s107
    %p121 = scmp.eq.s32.totalorder %s15, 3
    %p122 = por %p120, %p121
    %p124 = scmp.ne.s32.totalorder %s107, %s123
    %p125 = scmp.eq.s32.totalorder %s15, 0
    %p126 = por %p124, %p125
    %p127 = scmp.le.s32.totalorder 1, %s9
    %p128 = scmp.lt.s32.totalorder %s9, 5
    %p129 = pnand %p127, %p128
    %p130 = pneg %p129
    // Predicated region
    $region9: #{piano_roll_lstm_forward.2} parent=5 // pred_check
      _
    $region10: #{piano_roll_lstm_forward.2} parent=5 // pred_check_branch
      %132 = sbr.rel (%p129) target = $region12
    $region11: #{piano_roll_lstm_forward.2} parent=5 // pred_region
      %s133 = ssub.s32 %s9, 1
      // Predicated region
      $region13: #{piano_roll_lstm_forward.2} parent=11 // pred_check
        %p134 = pneg %p70
      $region14: #{piano_roll_lstm_forward.2} parent=11 // pred_check_branch
        %136 = sbr.rel (%p134) target = $region16
      $region15: #{piano_roll_lstm_forward.2} parent=11 // pred_region
        _
      $region16: #{piano_roll_lstm_forward.2} parent=11 // pred_fallthru
        _
      // Predicated region
      $region17: #{piano_roll_lstm_forward.2} parent=11 // pred_check
        %p137 = pneg %p91
      $region18: #{piano_roll_lstm_forward.2} parent=11 // pred_check_branch
        %139 = sbr.rel (%p137) target = $region20
      $region19: #{piano_roll_lstm_forward.2} parent=11 // pred_region
        _
      $region20: #{piano_roll_lstm_forward.2} parent=11 // pred_fallthru
        _
    $region12: #{piano_roll_lstm_forward.2} parent=5 // pred_fallthru
      _
    %p140 = scmp.lt.s32.totalorder %s9, 4
    // Predicated region
    $region21: #{piano_roll_lstm_forward.2} parent=5 // pred_check
      %p141 = pneg %p140
    $region22: #{piano_roll_lstm_forward.2} parent=5 // pred_check_branch
      %143 = sbr.rel (%p141) target = $region24
    $region23: #{piano_roll_lstm_forward.2} parent=5 // pred_region
      // Predicated region
      $region25: #{piano_roll_lstm_forward.2} parent=23 // pred_check
        %p144 = pneg %p43
      $region26: #{piano_roll_lstm_forward.2} parent=23 // pred_check_branch
        %146 = sbr.rel (%p144) target = $region28
      $region27: #{piano_roll_lstm_forward.2} parent=23 // pred_region
        %p147 = scmp.lt.s32.totalorder %s17, 3
        %s148 = scalar_select %p147, %s17, 3
        %p149 = scmp.lt.s32.totalorder %s16, 0
        %s150 = scalar_select %p149, %s16, 0
        %s151 = sadd.s32 %s150, %s148
        %s152 = smul.addr %s151, 8
        %s153 = scalar_lea.vmem %s0, %s152
      $region28: #{piano_roll_lstm_forward.2} parent=23 // pred_fallthru
        _
    $region24: #{piano_roll_lstm_forward.2} parent=5 // pred_fallthru
      _
    %p154 = scmp.le.s32.totalorder 1, %s9
    %p155 = scmp.lt.s32.totalorder %s9, 5
    %p156 = pnand %p154, %p155
    %p157 = pneg %p156
    // Predicated region
    $region29: #{piano_roll_lstm_forward.2} parent=5 // pred_check
      _
    $region30: #{piano_roll_lstm_forward.2} parent=5 // pred_check_branch
      %159 = sbr.rel (%p156) target = $region32
    $region31: #{piano_roll_lstm_forward.2} parent=5 // pred_region
      %s160 = ssub.s32 %s9, 1
      %p161 = scmp.lt.s32.totalorder %s19, 3
      %s162 = scalar_select %p161, %s19, 3
      %p163 = scmp.lt.s32.totalorder %s18, 0
      %s164 = scalar_select %p163, %s18, 0
      %s165 = sadd.s32 %s164, %s162
      %s166 = smul.addr %s165, 8
      %s167 = scalar_lea.vmem %s0, %s166
      %p168 = pneg %p49
      %p169 = pneg %p46
      %p170 = pneg %p70
      %p171 = pneg %p67
      %p172 = pneg %p91
      %p173 = pneg %p88
      %p174 = pneg %p119
      %p175 = pneg %p116
      %s176 = smul.u32 4, %s19
      %p177 = scmp.lt.s32.totalorder %s18, 0
      %s178 = scalar_select %p177, %s18, 0
      %p179 = scmp.lt.s32.totalorder %s176, 15
      %s180 = scalar_select %p179, %s176, 15
      %s181 = smul.addr %s178, 16
      %s182 = sadd.s32 %s180, %s181
      %s183 = smul.addr %s182, 8
      %s184 = scalar_lea.vmem %s3, %s183
      %p185 = scmp.lt.s32.totalorder %s19, 3
      %s186 = scalar_select %p185, %s19, 3
      %p187 = scmp.lt.s32.totalorder %s18, 0
      %s188 = scalar_select %p187, %s18, 0
      %s189 = sadd.s32 %s188, %s186
      %s190 = smul.addr %s189, 8
      %s191 = scalar_lea.vmem %s0, %s190
      %s192 = smul.u32 4, %s19
      %p193 = scmp.lt.s32.totalorder %s18, 0
      %s194 = scalar_select %p193, %s18, 0
      %p195 = scmp.lt.s32.totalorder %s192, 15
      %s196 = scalar_select %p195, %s192, 15
      %s197 = smul.addr %s194, 16
      %s198 = sadd.s32 %s196, %s197
      %s199 = smul.addr %s198, 8
      %s200 = scalar_lea.vmem %s3, %s199
      %s201 = smul.u32 4, %s19
      %v203 = vld [vmem:[%s191] sm:$0xff]
      %v204 = vpack.c.bf16 %v203, %v203
      %v205 = vld [vmem:[%s1] sm:$0xff]
      %v206 = vld [vmem:[%s1 + $0x8] sm:$0xff]
      %v207 = vld [vmem:[%s1 + $0x10] sm:$0xff]
      %v208 = vld [vmem:[%s1 + $0x18] sm:$0xff]
      %v209 = vld [vmem:[%s1 + $0x20] sm:$0xff]
      %v210 = vld [vmem:[%s1 + $0x28] sm:$0xff]
      %v211 = vld [vmem:[%s1 + $0x30] sm:$0xff]
      %v212 = vld [vmem:[%s1 + $0x38] sm:$0xff]
      %v213 = vld [vmem:[%s1 + $0x40] sm:$0xff]
      %v214 = vld [vmem:[%s1 + $0x48] sm:$0xff]
      %v215 = vld [vmem:[%s1 + $0x50] sm:$0xff]
      %v216 = vld [vmem:[%s1 + $0x58] sm:$0xff]
      %v217 = vld [vmem:[%s1 + $0x60] sm:$0xff]
      %v218 = vld [vmem:[%s1 + $0x68] sm:$0xff]
      %v219 = vld [vmem:[%s1 + $0x70] sm:$0xff]
      %v220 = vld [vmem:[%s1 + $0x78] sm:$0xff]
      %v221 = vld [vmem:[%s1 + $0x80] sm:$0xff]
      %v222 = vld [vmem:[%s1 + $0x88] sm:$0xff]
      %v223 = vld [vmem:[%s1 + $0x90] sm:$0xff]
      %v224 = vld [vmem:[%s1 + $0x98] sm:$0xff]
      %v225 = vld [vmem:[%s1 + $0xa0] sm:$0xff]
      %v226 = vld [vmem:[%s1 + $0xa8] sm:$0xff]
      %v227 = vld [vmem:[%s1 + $0xb0] sm:$0xff]
      %v228 = vld [vmem:[%s1 + $0xb8] sm:$0xff]
      %v229 = vld [vmem:[%s1 + $0xc0] sm:$0xff]
      %v230 = vld [vmem:[%s1 + $0xc8] sm:$0xff]
      %v231 = vld [vmem:[%s1 + $0xd0] sm:$0xff]
      %v232 = vld [vmem:[%s1 + $0xd8] sm:$0xff]
      %v233 = vld [vmem:[%s1 + $0xe0] sm:$0xff]
      %v234 = vld [vmem:[%s1 + $0xe8] sm:$0xff]
      %v235 = vld [vmem:[%s1 + $0xf0] sm:$0xff]
      %v236 = vld [vmem:[%s1 + $0xf8] sm:$0xff]
      %v237 = vld [vmem:[%s2] sm:$0xf]
      %v239 = vlaneseq
      %v240 = vshrl.u32 %v239, 7
      %v241 = vsub.s32 0, %v240
      %v242 = vrot.slane %v237, %v241
      %v243 = vlaneseq
      %v244 = vshrl.u32 %v243, 7
      %v245 = vsub.s32 1, %v244
      %v246 = vrot.slane %v237, %v245
      %v247 = vlaneseq
      %v248 = vshrl.u32 %v247, 7
      %v249 = vsub.s32 2, %v248
      %v250 = vrot.slane %v237, %v249
      %v251 = vlaneseq
      %v252 = vshrl.u32 %v251, 7
      %v253 = vsub.s32 3, %v252
      %v254 = vrot.slane %v237, %v253
      %v291 = vunpack.c.l.b16 %v205
      %v292 = vunpack.c.h.b16 %v205
      %v293 = vunpack.c.l.b16 %v206
      %v294 = vunpack.c.h.b16 %v206
      %v295 = vunpack.c.l.b16 %v207
      %v296 = vunpack.c.h.b16 %v207
      %v297 = vunpack.c.l.b16 %v208
      %v298 = vunpack.c.h.b16 %v208
      %v299 = vunpack.c.l.b16 %v209
      %v300 = vunpack.c.h.b16 %v209
      %v301 = vunpack.c.l.b16 %v210
      %v302 = vunpack.c.h.b16 %v210
      %v303 = vunpack.c.l.b16 %v211
      %v304 = vunpack.c.h.b16 %v211
      %v305 = vunpack.c.l.b16 %v212
      %v306 = vunpack.c.h.b16 %v212
      %v307 = vunpack.c.l.b16 %v213
      %v308 = vunpack.c.h.b16 %v213
      %v309 = vunpack.c.l.b16 %v214
      %v310 = vunpack.c.h.b16 %v214
      %v311 = vunpack.c.l.b16 %v215
      %v312 = vunpack.c.h.b16 %v215
      %v313 = vunpack.c.l.b16 %v216
      %v314 = vunpack.c.h.b16 %v216
      %v315 = vunpack.c.l.b16 %v217
      %v316 = vunpack.c.h.b16 %v217
      %v317 = vunpack.c.l.b16 %v218
      %v318 = vunpack.c.h.b16 %v218
      %v319 = vunpack.c.l.b16 %v219
      %v320 = vunpack.c.h.b16 %v219
      %v321 = vunpack.c.l.b16 %v220
      %v322 = vunpack.c.h.b16 %v220
      %v323 = vunpack.c.l.b16 %v221
      %v324 = vunpack.c.h.b16 %v221
      %v325 = vunpack.c.l.b16 %v222
      %v326 = vunpack.c.h.b16 %v222
      %v327 = vunpack.c.l.b16 %v223
      %v328 = vunpack.c.h.b16 %v223
      %v329 = vunpack.c.l.b16 %v224
      %v330 = vunpack.c.h.b16 %v224
      %v331 = vunpack.c.l.b16 %v225
      %v332 = vunpack.c.h.b16 %v225
      %v333 = vunpack.c.l.b16 %v226
      %v334 = vunpack.c.h.b16 %v226
      %v335 = vunpack.c.l.b16 %v227
      %v336 = vunpack.c.h.b16 %v227
      %v337 = vunpack.c.l.b16 %v228
      %v338 = vunpack.c.h.b16 %v228
      %v339 = vunpack.c.l.b16 %v229
      %v340 = vunpack.c.h.b16 %v229
      %v341 = vunpack.c.l.b16 %v230
      %v342 = vunpack.c.h.b16 %v230
      %v343 = vunpack.c.l.b16 %v231
      %v344 = vunpack.c.h.b16 %v231
      %v345 = vunpack.c.l.b16 %v232
      %v346 = vunpack.c.h.b16 %v232
      %v347 = vunpack.c.l.b16 %v233
      %v348 = vunpack.c.h.b16 %v233
      %v349 = vunpack.c.l.b16 %v234
      %v350 = vunpack.c.h.b16 %v234
      %v351 = vunpack.c.l.b16 %v235
      %v352 = vunpack.c.h.b16 %v235
      %v353 = vunpack.c.l.b16 %v236
      %v354 = vunpack.c.h.b16 %v236
      %v355 = vpack.c.b16 %v295, %v291
      %v356 = vpack.c.b16 %v296, %v292
      %v357 = vpack.c.b16 %v297, %v293
      %v358 = vpack.c.b16 %v298, %v294
      %v359 = vpack.c.b16 %v303, %v299
      %v360 = vpack.c.b16 %v304, %v300
      %v361 = vpack.c.b16 %v305, %v301
      %v362 = vpack.c.b16 %v306, %v302
      %v363 = vpack.c.b16 %v311, %v307
      %v364 = vpack.c.b16 %v312, %v308
      %v365 = vpack.c.b16 %v313, %v309
      %v366 = vpack.c.b16 %v314, %v310
      %v367 = vpack.c.b16 %v319, %v315
      %v368 = vpack.c.b16 %v320, %v316
      %v369 = vpack.c.b16 %v321, %v317
      %v370 = vpack.c.b16 %v322, %v318
      %v371 = vpack.c.b16 %v327, %v323
      %v372 = vpack.c.b16 %v328, %v324
      %v373 = vpack.c.b16 %v329, %v325
      %v374 = vpack.c.b16 %v330, %v326
      %v375 = vpack.c.b16 %v335, %v331
      %v376 = vpack.c.b16 %v336, %v332
      %v377 = vpack.c.b16 %v337, %v333
      %v378 = vpack.c.b16 %v338, %v334
      %v379 = vpack.c.b16 %v343, %v339
      %v380 = vpack.c.b16 %v344, %v340
      %v381 = vpack.c.b16 %v345, %v341
      %v382 = vpack.c.b16 %v346, %v342
      %v383 = vpack.c.b16 %v351, %v347
      %v384 = vpack.c.b16 %v352, %v348
      %v385 = vpack.c.b16 %v353, %v349
      %v386 = vpack.c.b16 %v354, %v350
      %419 = vmatprep.subr.bf16.mxu0 %v384
      %420 = vmatpush1.bf16.msra.mxu0 %v383
      %421 = vmatprep.subr.bf16.mxu0 %v380
      %422 = vmatpush1.bf16.msra.mxu0 %v379
      %423 = vmatprep.subr.bf16.mxu0 %v376
      %424 = vmatpush1.bf16.msra.mxu0 %v375
      %425 = vmatprep.subr.bf16.mxu0 %v372
      %426 = vmatpush1.bf16.msra.mxu0 %v371
      %427 = vmatprep.subr.bf16.mxu0 %v368
      %428 = vmatpush1.bf16.msra.mxu0 %v367
      %429 = vmatprep.subr.bf16.mxu0 %v364
      %430 = vmatpush1.bf16.msra.mxu0 %v363
      %431 = vmatprep.subr.bf16.mxu0 %v360
      %432 = vmatpush1.bf16.msra.mxu0 %v359
      %433 = vmatprep.subr.bf16.mxu0 %v356
      %434 = vmatpush1.bf16.msra.mxu0 %v355
      %435 = vmatprep.subr.bf16.mxu0 0
      %436 = vmatpush2.bf16.msra.mxu0 0
      %437 = vmatprep.subr.bf16.mxu0 0
      %438 = vmatpush2.bf16.msra.mxu0 0
      %439 = vmatprep.subr.bf16.mxu0 0
      %440 = vmatpush2.bf16.msra.mxu0 0
      %441 = vmatprep.subr.bf16.mxu0 0
      %442 = vmatpush2.bf16.msra.mxu0 0
      %443 = vmatprep.subr.bf16.mxu0 0
      %444 = vmatpush2.bf16.msra.mxu0 0
      %445 = vmatprep.subr.bf16.mxu0 0
      %446 = vmatpush2.bf16.msra.mxu0 0
      %447 = vmatprep.subr.bf16.mxu0 0
      %448 = vmatpush2.bf16.msra.mxu0 0
      %449 = vmatprep.subr.bf16.mxu0 0
      %450 = vmatpush2.bf16.msra.mxu0 0
      %451 = vmatprep.mubr.bf16.mxu0 0
      %452 = vmatmul.mubr.bf16.gmra.mxu0 %v204
      %v453 = vpop.f32.mrf.mxu0
      %v454 = vadd.f32 %v242, %v453
      %v455 = vpop.f32.mrf.mxu0
      %v456 = vadd.f32 %v246, %v455
      %v457 = vpop.f32.mrf.mxu0
      %v458 = vpop.f32.mrf.mxu0
      %459 = vdwg.mxu0
      %460 = vmatprep.subr.bf16.mxu0 %v386
      %461 = vmatpush1.bf16.msra.mxu0 %v385
      %462 = vmatprep.subr.bf16.mxu0 %v382
      %463 = vmatpush1.bf16.msra.mxu0 %v381
      %464 = vmatprep.subr.bf16.mxu0 %v378
      %465 = vmatpush1.bf16.msra.mxu0 %v377
      %466 = vmatprep.subr.bf16.mxu0 %v374
      %467 = vmatpush1.bf16.msra.mxu0 %v373
      %468 = vmatprep.subr.bf16.mxu0 %v370
      %469 = vmatpush1.bf16.msra.mxu0 %v369
      %470 = vmatprep.subr.bf16.mxu0 %v366
      %471 = vmatpush1.bf16.msra.mxu0 %v365
      %472 = vmatprep.subr.bf16.mxu0 %v362
      %473 = vmatpush1.bf16.msra.mxu0 %v361
      %474 = vmatprep.subr.bf16.mxu0 %v358
      %475 = vmatpush1.bf16.msra.mxu0 %v357
      %476 = vmatprep.subr.bf16.mxu0 0
      %477 = vmatpush2.bf16.msra.mxu0 0
      %478 = vmatprep.subr.bf16.mxu0 0
      %479 = vmatpush2.bf16.msra.mxu0 0
      %480 = vmatprep.subr.bf16.mxu0 0
      %481 = vmatpush2.bf16.msra.mxu0 0
      %482 = vmatprep.subr.bf16.mxu0 0
      %483 = vmatpush2.bf16.msra.mxu0 0
      %484 = vmatprep.subr.bf16.mxu0 0
      %485 = vmatpush2.bf16.msra.mxu0 0
      %486 = vmatprep.subr.bf16.mxu0 0
      %487 = vmatpush2.bf16.msra.mxu0 0
      %488 = vmatprep.subr.bf16.mxu0 0
      %489 = vmatpush2.bf16.msra.mxu0 0
      %490 = vmatprep.subr.bf16.mxu0 0
      %491 = vmatpush2.bf16.msra.mxu0 0
      %492 = vmatprep.mubr.bf16.mxu0 0
      %493 = vmatmul.mubr.bf16.gmra.mxu0 %v204
      %v494 = vpop.f32.mrf.mxu0
      %v495 = vadd.f32 %v250, %v494
      %v496 = vpop.f32.mrf.mxu0
      %v497 = vadd.f32 %v254, %v496
      %v498 = vpop.f32.mrf.mxu0
      %v499 = vpop.f32.mrf.mxu0
      %500 = vdwg.mxu0
      %501 = vst [vmem:[%s200] sm:$0xff] %v454
      %502 = vst [vmem:[%s200 + $0x8] sm:$0xff] %v456
      %503 = vst [vmem:[%s200 + $0x10] sm:$0xff] %v495
      %504 = vst [vmem:[%s200 + $0x18] sm:$0xff] %v497
      %s505 = smul.u32 4, %s19
      %p506 = scmp.lt.s32.totalorder %s18, 0
      %s507 = scalar_select %p506, %s18, 0
      %p508 = scmp.lt.s32.totalorder %s505, 15
      %s509 = scalar_select %p508, %s505, 15
      %s510 = smul.addr %s507, 16
      %s511 = sadd.s32 %s509, %s510
      %s512 = smul.addr %s511, 8
      %s513 = scalar_lea.vmem %s3, %s512
      // Predicated region
      $region33: #{piano_roll_lstm_forward.2} parent=31 // pred_check
        %p514 = pneg %p116
      $region34: #{piano_roll_lstm_forward.2} parent=31 // pred_check_branch
        %516 = sbr.rel (%p514) target = $region36
      $region35: #{piano_roll_lstm_forward.2} parent=31 // pred_region
        %s517 = smul.u32 4, %s19
      $region36: #{piano_roll_lstm_forward.2} parent=31 // pred_fallthru
        _
    $region32: #{piano_roll_lstm_forward.2} parent=5 // pred_fallthru
      _
    %p518 = scmp.le.s32.totalorder 2, %s9
    // Predicated region
    $region37: #{piano_roll_lstm_forward.2} parent=5 // pred_check
      %p519 = pneg %p518
    $region38: #{piano_roll_lstm_forward.2} parent=5 // pred_check_branch
      %521 = sbr.rel (%p519) target = $region40
    $region39: #{piano_roll_lstm_forward.2} parent=5 // pred_region
      %s522 = ssub.s32 %s9, 2
      // Predicated region
      $region41: #{piano_roll_lstm_forward.2} parent=39 // pred_check
        %p523 = pneg %p122
      $region42: #{piano_roll_lstm_forward.2} parent=39 // pred_check_branch
        %525 = sbr.rel (%p523) target = $region44
      $region43: #{piano_roll_lstm_forward.2} parent=39 // pred_region
        %s526 = smul.u32 4, %s21
        %p527 = scmp.lt.s32.totalorder %s20, 0
        %s528 = scalar_select %p527, %s20, 0
        %p529 = scmp.lt.s32.totalorder %s526, 15
        %s530 = scalar_select %p529, %s526, 15
        %s531 = smul.addr %s528, 16
        %s532 = sadd.s32 %s530, %s531
        %s533 = smul.addr %s532, 8
        %s534 = scalar_lea.vmem %s3, %s533
      $region44: #{piano_roll_lstm_forward.2} parent=39 // pred_fallthru
        _
    $region40: #{piano_roll_lstm_forward.2} parent=5 // pred_fallthru
      _
  $region6: #{piano_roll_lstm_forward.2} parent=0 // loop_footer
    %s13 = sadd.s32 1, %s9
  $region7: #{piano_roll_lstm_forward.2} parent=0 // loop_footer_branch
    %8 = sbr.rel target = $region3
  $region8: #{piano_roll_lstm_forward.2} parent=0 // loop_exit
    _

// kernel: piano_roll_lstm_forward.3
$region0: #{piano_roll_lstm_forward.3}
  #allocation0 [shape = 'u32[]', space=smem, size = 0x4, offset = 0x4, fixed_abs, tag = 'smem constant byte address 0x4 - core index']
  #allocation1 [shape = 'u32[144,128]{1,0:T(1,128)}', space=vmem, size = 0x12000, scoped, tag = 'internal scratch']
  #allocation2 [shape = 'f32[4,128]{1,0:T(4,128)}', space=vmem, size = 0x800, scoped, tag = 'scratch operand']
  #allocation3 [shape = 'f32[4,128]{1,0:T(4,128)}', space=vmem, size = 0x800, scoped, tag = 'scratch operand']
  %s0 = inlined_call_operand.vmem [shape: f32[8,4,512], index: 0, kind: input, shape index: {}]
  %s1 = inlined_call_operand.vmem [shape: bf16[128,512], index: 1, kind: input, shape index: {}]
  %s2 = inlined_call_operand.vmem [shape: f32[1,128], index: 2, kind: input, shape index: {}]
  %s3 = inlined_call_operand.vmem [shape: f32[1,128], index: 3, kind: input, shape index: {}]
  %s4 = inlined_call_operand.vmem [shape: bf16[128,128], index: 4, kind: input, shape index: {}]
  %s5 = inlined_call_operand.vmem [shape: f32[1,128], index: 5, kind: input, shape index: {}]
  %s6 = inlined_call_operand.hbm [shape: f32[4,128], index: 6, kind: output, shape index: {}]
  %s7 = sld [smem:[#allocation0]]
  $region42: #{piano_roll_lstm_forward.3} parent=0
    _
  %s9 = ssub.s32 1, %s7
  %s10 = scalar_select 0, %s9, %s7
  $region1: #{piano_roll_lstm_forward.3} parent=0
    #allocation4 [shape = 'u8[2048]{0}', space=vmem, size = 0x800, scoped, tag = 'output window, operand 0, single buffered']
    #allocation5 [shape = 's32[1]{0}', space=sflag, size = 0x4, scoped, tag = 'scoped memory for piano_roll_lstm_forward.3']
    %11 = vsyncpa [#allocation5], 0
    // Predicated region
    $region2: #{piano_roll_lstm_forward.3} parent=1 // pred_check
      _
    $region3: #{piano_roll_lstm_forward.3} parent=1 // pred_check_branch
      %13 = sbr.rel (0) target = $region5
    $region4: #{piano_roll_lstm_forward.3} parent=1 // pred_region
      _
    $region5: #{piano_roll_lstm_forward.3} parent=1 // pred_fallthru
      _
    // Predicated region
    $region6: #{piano_roll_lstm_forward.3} parent=1 // pred_check
      _
    $region7: #{piano_roll_lstm_forward.3} parent=1 // pred_check_branch
      %15 = sbr.rel (0) target = $region9
    $region8: #{piano_roll_lstm_forward.3} parent=1 // pred_region
      _
    $region9: #{piano_roll_lstm_forward.3} parent=1 // pred_fallthru
      _
    // Predicated region
    $region10: #{piano_roll_lstm_forward.3} parent=1 // pred_check
      _
    $region11: #{piano_roll_lstm_forward.3} parent=1 // pred_check_branch
      %17 = sbr.rel (0) target = $region13
    $region12: #{piano_roll_lstm_forward.3} parent=1 // pred_region
      _
    $region13: #{piano_roll_lstm_forward.3} parent=1 // pred_fallthru
      _
    // Predicated region
    $region14: #{piano_roll_lstm_forward.3} parent=1 // pred_check
      _
    $region15: #{piano_roll_lstm_forward.3} parent=1 // pred_check_branch
      %19 = sbr.rel (0) target = $region17
    $region16: #{piano_roll_lstm_forward.3} parent=1 // pred_region
      _
    $region17: #{piano_roll_lstm_forward.3} parent=1 // pred_fallthru
      _
    // Predicated region
    $region18: #{piano_roll_lstm_forward.3} parent=1 // pred_check
      _
    $region19: #{piano_roll_lstm_forward.3} parent=1 // pred_check_branch
      %21 = sbr.rel (0) target = $region21
    $region20: #{piano_roll_lstm_forward.3} parent=1 // pred_region
      _
    $region21: #{piano_roll_lstm_forward.3} parent=1 // pred_fallthru
      _
    // Predicated region
    $region22: #{piano_roll_lstm_forward.3} parent=1 // pred_check
      _
    $region23: #{piano_roll_lstm_forward.3} parent=1 // pred_check_branch
      %23 = sbr.rel (0) target = $region25
    $region24: #{piano_roll_lstm_forward.3} parent=1 // pred_region
      _
    $region25: #{piano_roll_lstm_forward.3} parent=1 // pred_fallthru
      _
    %p25 = scmp.eq.s32.totalorder 0, 0
    // Predicated region
    $region26: #{piano_roll_lstm_forward.3} parent=1 // pred_check
      %p26 = pneg %p25
    $region27: #{piano_roll_lstm_forward.3} parent=1 // pred_check_branch
      %28 = sbr.rel (%p26) target = $region29
    $region28: #{piano_roll_lstm_forward.3} parent=1 // pred_region
      %29 = vst [vmem:[#allocation2] sm:$0xf] 0.0
      %30 = vst [vmem:[#allocation3] sm:$0xf] 0.0
    $region29: #{piano_roll_lstm_forward.3} parent=1 // pred_fallthru
      _
    %v31 = vld [vmem:[#allocation2] sm:$0xf]
    %v32 = vld [vmem:[#allocation3] sm:$0xf]
    %v33 = vld [vmem:[%s0] sm:$0xff]
    %v34 = vld [vmem:[%s0 + $0x8] sm:$0xff]
    %v35 = vpack.c.bf16 %v31, %v31
    %v36 = vld [vmem:[%s1] sm:$0xff]
    %v37 = vld [vmem:[%s1 + $0x8] sm:$0xff]
    %v38 = vld [vmem:[%s1 + $0x10] sm:$0xff]
    %v39 = vld [vmem:[%s1 + $0x18] sm:$0xff]
    %v40 = vld [vmem:[%s1 + $0x20] sm:$0xff]
    %v41 = vld [vmem:[%s1 + $0x28] sm:$0xff]
    %v42 = vld [vmem:[%s1 + $0x30] sm:$0xff]
    %v43 = vld [vmem:[%s1 + $0x38] sm:$0xff]
    %v44 = vld [vmem:[%s1 + $0x40] sm:$0xff]
    %v45 = vld [vmem:[%s1 + $0x48] sm:$0xff]
    %v46 = vld [vmem:[%s1 + $0x50] sm:$0xff]
    %v47 = vld [vmem:[%s1 + $0x58] sm:$0xff]
    %v48 = vld [vmem:[%s1 + $0x60] sm:$0xff]
    %v49 = vld [vmem:[%s1 + $0x68] sm:$0xff]
    %v50 = vld [vmem:[%s1 + $0x70] sm:$0xff]
    %v51 = vld [vmem:[%s1 + $0x78] sm:$0xff]
    %v52 = vld [vmem:[%s1 + $0x80] sm:$0xff]
    %v53 = vld [vmem:[%s1 + $0x88] sm:$0xff]
    %v54 = vld [vmem:[%s1 + $0x90] sm:$0xff]
    %v55 = vld [vmem:[%s1 + $0x98] sm:$0xff]
    %v56 = vld [vmem:[%s1 + $0xa0] sm:$0xff]
    %v57 = vld [vmem:[%s1 + $0xa8] sm:$0xff]
    %v58 = vld [vmem:[%s1 + $0xb0] sm:$0xff]
    %v59 = vld [vmem:[%s1 + $0xb8] sm:$0xff]
    %v60 = vld [vmem:[%s1 + $0xc0] sm:$0xff]
    %v61 = vld [vmem:[%s1 + $0xc8] sm:$0xff]
    %v62 = vld [vmem:[%s1 + $0xd0] sm:$0xff]
    %v63 = vld [vmem:[%s1 + $0xd8] sm:$0xff]
    %v64 = vld [vmem:[%s1 + $0xe0] sm:$0xff]
    %v65 = vld [vmem:[%s1 + $0xe8] sm:$0xff]
    %v66 = vld [vmem:[%s1 + $0xf0] sm:$0xff]
    %v67 = vld [vmem:[%s1 + $0xf8] sm:$0xff]
    %v100 = vunpack.c.l.b16 %v36
    %v101 = vunpack.c.h.b16 %v36
    %v102 = vunpack.c.l.b16 %v37
    %v103 = vunpack.c.h.b16 %v37
    %v104 = vunpack.c.l.b16 %v38
    %v105 = vunpack.c.h.b16 %v38
    %v106 = vunpack.c.l.b16 %v39
    %v107 = vunpack.c.h.b16 %v39
    %v108 = vunpack.c.l.b16 %v40
    %v109 = vunpack.c.h.b16 %v40
    %v110 = vunpack.c.l.b16 %v41
    %v111 = vunpack.c.h.b16 %v41
    %v112 = vunpack.c.l.b16 %v42
    %v113 = vunpack.c.h.b16 %v42
    %v114 = vunpack.c.l.b16 %v43
    %v115 = vunpack.c.h.b16 %v43
    %v116 = vunpack.c.l.b16 %v44
    %v117 = vunpack.c.h.b16 %v44
    %v118 = vunpack.c.l.b16 %v45
    %v119 = vunpack.c.h.b16 %v45
    %v120 = vunpack.c.l.b16 %v46
    %v121 = vunpack.c.h.b16 %v46
    %v122 = vunpack.c.l.b16 %v47
    %v123 = vunpack.c.h.b16 %v47
    %v124 = vunpack.c.l.b16 %v48
    %v125 = vunpack.c.h.b16 %v48
    %v126 = vunpack.c.l.b16 %v49
    %v127 = vunpack.c.h.b16 %v49
    %v128 = vunpack.c.l.b16 %v50
    %v129 = vunpack.c.h.b16 %v50
    %v130 = vunpack.c.l.b16 %v51
    %v131 = vunpack.c.h.b16 %v51
    %v132 = vunpack.c.l.b16 %v52
    %v133 = vunpack.c.h.b16 %v52
    %v134 = vunpack.c.l.b16 %v53
    %v135 = vunpack.c.h.b16 %v53
    %v136 = vunpack.c.l.b16 %v54
    %v137 = vunpack.c.h.b16 %v54
    %v138 = vunpack.c.l.b16 %v55
    %v139 = vunpack.c.h.b16 %v55
    %v140 = vunpack.c.l.b16 %v56
    %v141 = vunpack.c.h.b16 %v56
    %v142 = vunpack.c.l.b16 %v57
    %v143 = vunpack.c.h.b16 %v57
    %v144 = vunpack.c.l.b16 %v58
    %v145 = vunpack.c.h.b16 %v58
    %v146 = vunpack.c.l.b16 %v59
    %v147 = vunpack.c.h.b16 %v59
    %v148 = vunpack.c.l.b16 %v60
    %v149 = vunpack.c.h.b16 %v60
    %v150 = vunpack.c.l.b16 %v61
    %v151 = vunpack.c.h.b16 %v61
    %v152 = vunpack.c.l.b16 %v62
    %v153 = vunpack.c.h.b16 %v62
    %v154 = vunpack.c.l.b16 %v63
    %v155 = vunpack.c.h.b16 %v63
    %v156 = vunpack.c.l.b16 %v64
    %v157 = vunpack.c.h.b16 %v64
    %v158 = vunpack.c.l.b16 %v65
    %v159 = vunpack.c.h.b16 %v65
    %v160 = vunpack.c.l.b16 %v66
    %v161 = vunpack.c.h.b16 %v66
    %v162 = vunpack.c.l.b16 %v67
    %v163 = vunpack.c.h.b16 %v67
    %v164 = vpack.c.b16 %v104, %v100
    %v165 = vpack.c.b16 %v105, %v101
    %v166 = vpack.c.b16 %v106, %v102
    %v167 = vpack.c.b16 %v107, %v103
    %v168 = vpack.c.b16 %v112, %v108
    %v169 = vpack.c.b16 %v113, %v109
    %v170 = vpack.c.b16 %v114, %v110
    %v171 = vpack.c.b16 %v115, %v111
    %v172 = vpack.c.b16 %v120, %v116
    %v173 = vpack.c.b16 %v121, %v117
    %v174 = vpack.c.b16 %v122, %v118
    %v175 = vpack.c.b16 %v123, %v119
    %v176 = vpack.c.b16 %v128, %v124
    %v177 = vpack.c.b16 %v129, %v125
    %v178 = vpack.c.b16 %v130, %v126
    %v179 = vpack.c.b16 %v131, %v127
    %v180 = vpack.c.b16 %v136, %v132
    %v181 = vpack.c.b16 %v137, %v133
    %v182 = vpack.c.b16 %v138, %v134
    %v183 = vpack.c.b16 %v139, %v135
    %v184 = vpack.c.b16 %v144, %v140
    %v185 = vpack.c.b16 %v145, %v141
    %v186 = vpack.c.b16 %v146, %v142
    %v187 = vpack.c.b16 %v147, %v143
    %v188 = vpack.c.b16 %v152, %v148
    %v189 = vpack.c.b16 %v153, %v149
    %v190 = vpack.c.b16 %v154, %v150
    %v191 = vpack.c.b16 %v155, %v151
    %v192 = vpack.c.b16 %v160, %v156
    %v193 = vpack.c.b16 %v161, %v157
    %v194 = vpack.c.b16 %v162, %v158
    %v195 = vpack.c.b16 %v163, %v159
    %228 = vmatprep.subr.bf16.mxu0 %v193
    %229 = vmatpush1.bf16.msra.mxu0 %v192
    %230 = vmatprep.subr.bf16.mxu0 %v189
    %231 = vmatpush1.bf16.msra.mxu0 %v188
    %232 = vmatprep.subr.bf16.mxu0 %v185
    %233 = vmatpush1.bf16.msra.mxu0 %v184
    %234 = vmatprep.subr.bf16.mxu0 %v181
    %235 = vmatpush1.bf16.msra.mxu0 %v180
    %236 = vmatprep.subr.bf16.mxu0 %v177
    %237 = vmatpush1.bf16.msra.mxu0 %v176
    %238 = vmatprep.subr.bf16.mxu0 %v173
    %239 = vmatpush1.bf16.msra.mxu0 %v172
    %240 = vmatprep.subr.bf16.mxu0 %v169
    %241 = vmatpush1.bf16.msra.mxu0 %v168
    %242 = vmatprep.subr.bf16.mxu0 %v165
    %243 = vmatpush1.bf16.msra.mxu0 %v164
    %244 = vmatprep.subr.bf16.mxu0 0
    %245 = vmatpush2.bf16.msra.mxu0 0
    %246 = vmatprep.subr.bf16.mxu0 0
    %247 = vmatpush2.bf16.msra.mxu0 0
    %248 = vmatprep.subr.bf16.mxu0 0
    %249 = vmatpush2.bf16.msra.mxu0 0
    %250 = vmatprep.subr.bf16.mxu0 0
    %251 = vmatpush2.bf16.msra.mxu0 0
    %252 = vmatprep.subr.bf16.mxu0 0
    %253 = vmatpush2.bf16.msra.mxu0 0
    %254 = vmatprep.subr.bf16.mxu0 0
    %255 = vmatpush2.bf16.msra.mxu0 0
    %256 = vmatprep.subr.bf16.mxu0 0
    %257 = vmatpush2.bf16.msra.mxu0 0
    %258 = vmatprep.subr.bf16.mxu0 0
    %259 = vmatpush2.bf16.msra.mxu0 0
    %260 = vmatprep.mubr.bf16.mxu0 0
    %261 = vmatmul.mubr.bf16.gmra.mxu0 %v35
    %v262 = vpop.f32.mrf.mxu0
    %v263 = vadd.f32 0.0, %v262
    %v264 = vpop.f32.mrf.mxu0
    %v265 = vadd.f32 0.0, %v264
    %v266 = vpop.f32.mrf.mxu0
    %v267 = vpop.f32.mrf.mxu0
    %268 = vdwg.mxu0
    %269 = vmatprep.subr.bf16.mxu0 %v195
    %270 = vmatpush1.bf16.msra.mxu0 %v194
    %271 = vmatprep.subr.bf16.mxu0 %v191
    %272 = vmatpush1.bf16.msra.mxu0 %v190
    %273 = vmatprep.subr.bf16.mxu0 %v187
    %274 = vmatpush1.bf16.msra.mxu0 %v186
    %275 = vmatprep.subr.bf16.mxu0 %v183
    %276 = vmatpush1.bf16.msra.mxu0 %v182
    %277 = vmatprep.subr.bf16.mxu0 %v179
    %278 = vmatpush1.bf16.msra.mxu0 %v178
    %279 = vmatprep.subr.bf16.mxu0 %v175
    %280 = vmatpush1.bf16.msra.mxu0 %v174
    %281 = vmatprep.subr.bf16.mxu0 %v171
    %282 = vmatpush1.bf16.msra.mxu0 %v170
    %283 = vmatprep.subr.bf16.mxu0 %v167
    %284 = vmatpush1.bf16.msra.mxu0 %v166
    %285 = vmatprep.subr.bf16.mxu0 0
    %286 = vmatpush2.bf16.msra.mxu0 0
    %287 = vmatprep.subr.bf16.mxu0 0
    %288 = vmatpush2.bf16.msra.mxu0 0
    %289 = vmatprep.subr.bf16.mxu0 0
    %290 = vmatpush2.bf16.msra.mxu0 0
    %291 = vmatprep.subr.bf16.mxu0 0
    %292 = vmatpush2.bf16.msra.mxu0 0
    %293 = vmatprep.subr.bf16.mxu0 0
    %294 = vmatpush2.bf16.msra.mxu0 0
    %295 = vmatprep.subr.bf16.mxu0 0
    %296 = vmatpush2.bf16.msra.mxu0 0
    %297 = vmatprep.subr.bf16.mxu0 0
    %298 = vmatpush2.bf16.msra.mxu0 0
    %299 = vmatprep.subr.bf16.mxu0 0
    %300 = vmatpush2.bf16.msra.mxu0 0
    %301 = vmatprep.mubr.bf16.mxu0 0
    %302 = vmatmul.mubr.bf16.gmra.mxu0 %v35
    %v303 = vpop.f32.mrf.mxu0
    %v304 = vadd.f32 0.0, %v303
    %v305 = vpop.f32.mrf.mxu0
    %v306 = vadd.f32 0.0, %v305
    %v307 = vpop.f32.mrf.mxu0
    %v308 = vpop.f32.mrf.mxu0
    %309 = vdwg.mxu0
    %v314 = vcombine.low %v263, %v265
    %v315 = vcombine.low %v304, %v306
    %v318 = vadd.f32 %v33, %v314
    %v319 = vadd.f32 %v34, %v315
    %v320 = vxor.u32 %v318, 2147483648
    %v321 = vmul.f32 %v320, 1.442695
    %v322 = vpow.pop %v321
    %v323 = vadd.f32 %v322, 1.0
    %v324 = vrcp.pop %v323
    %v325 = vmul.f32 1.0, %v324
    %v327 = vrot.slane %v318, 4
    %v329 = vxor.u32 %v327, 2147483648
    %v330 = vmul.f32 %v329, 1.442695
    %v331 = vpow.pop %v330
    %v332 = vadd.f32 %v331, 1.0
    %v333 = vrcp.pop %v332
    %v334 = vmul.f32 1.0, %v333
    %v335 = vtanh.pop %v319
    %v337 = vrot.slane %v319, 4
    %v339 = vxor.u32 %v337, 2147483648
    %v340 = vmul.f32 %v339, 1.442695
    %v341 = vpow.pop %v340
    %v342 = vadd.f32 %v341, 1.0
    %v343 = vrcp.pop %v342
    %v344 = vmul.f32 1.0, %v343
    %v345 = vmul.f32 %v334, %v32
    %v346 = vmul.f32 %v325, %v335
    %v347 = vadd.f32 %v345, %v346
    %v348 = vtanh.pop %v347
    %v349 = vmul.f32 %v344, %v348
    %s350 = scalar_lea.vmem %s0, 16
    %v351 = vld [vmem:[%s350] sm:$0xff]
    %v352 = vld [vmem:[%s350 + $0x8] sm:$0xff]
    %v353 = vpack.c.bf16 %v349, %v349
    %354 = vmatprep.subr.bf16.mxu0 %v193
    %355 = vmatpush1.bf16.msra.mxu0 %v192
    %356 = vmatprep.subr.bf16.mxu0 %v189
    %357 = vmatpush1.bf16.msra.mxu0 %v188
    %358 = vmatprep.subr.bf16.mxu0 %v185
    %359 = vmatpush1.bf16.msra.mxu0 %v184
    %360 = vmatprep.subr.bf16.mxu0 %v181
    %361 = vmatpush1.bf16.msra.mxu0 %v180
    %362 = vmatprep.subr.bf16.mxu0 %v177
    %363 = vmatpush1.bf16.msra.mxu0 %v176
    %364 = vmatprep.subr.bf16.mxu0 %v173
    %365 = vmatpush1.bf16.msra.mxu0 %v172
    %366 = vmatprep.subr.bf16.mxu0 %v169
    %367 = vmatpush1.bf16.msra.mxu0 %v168
    %368 = vmatprep.subr.bf16.mxu0 %v165
    %369 = vmatpush1.bf16.msra.mxu0 %v164
    %370 = vmatprep.subr.bf16.mxu0 0
    %371 = vmatpush2.bf16.msra.mxu0 0
    %372 = vmatprep.subr.bf16.mxu0 0
    %373 = vmatpush2.bf16.msra.mxu0 0
    %374 = vmatprep.subr.bf16.mxu0 0
    %375 = vmatpush2.bf16.msra.mxu0 0
    %376 = vmatprep.subr.bf16.mxu0 0
    %377 = vmatpush2.bf16.msra.mxu0 0
    %378 = vmatprep.subr.bf16.mxu0 0
    %379 = vmatpush2.bf16.msra.mxu0 0
    %380 = vmatprep.subr.bf16.mxu0 0
    %381 = vmatpush2.bf16.msra.mxu0 0
    %382 = vmatprep.subr.bf16.mxu0 0
    %383 = vmatpush2.bf16.msra.mxu0 0
    %384 = vmatprep.subr.bf16.mxu0 0
    %385 = vmatpush2.bf16.msra.mxu0 0
    %386 = vmatprep.mubr.bf16.mxu0 0
    %387 = vmatmul.mubr.bf16.gmra.mxu0 %v353
    %v388 = vpop.f32.mrf.mxu0
    %v389 = vadd.f32 0.0, %v388
    %v390 = vpop.f32.mrf.mxu0
    %v391 = vadd.f32 0.0, %v390
    %v392 = vpop.f32.mrf.mxu0
    %v393 = vpop.f32.mrf.mxu0
    %394 = vdwg.mxu0
    %395 = vmatprep.subr.bf16.mxu0 %v195
    %396 = vmatpush1.bf16.msra.mxu0 %v194
    %397 = vmatprep.subr.bf16.mxu0 %v191
    %398 = vmatpush1.bf16.msra.mxu0 %v190
    %399 = vmatprep.subr.bf16.mxu0 %v187
    %400 = vmatpush1.bf16.msra.mxu0 %v186
    %401 = vmatprep.subr.bf16.mxu0 %v183
    %402 = vmatpush1.bf16.msra.mxu0 %v182
    %403 = vmatprep.subr.bf16.mxu0 %v179
    %404 = vmatpush1.bf16.msra.mxu0 %v178
    %405 = vmatprep.subr.bf16.mxu0 %v175
    %406 = vmatpush1.bf16.msra.mxu0 %v174
    %407 = vmatprep.subr.bf16.mxu0 %v171
    %408 = vmatpush1.bf16.msra.mxu0 %v170
    %409 = vmatprep.subr.bf16.mxu0 %v167
    %410 = vmatpush1.bf16.msra.mxu0 %v166
    %411 = vmatprep.subr.bf16.mxu0 0
    %412 = vmatpush2.bf16.msra.mxu0 0
    %413 = vmatprep.subr.bf16.mxu0 0
    %414 = vmatpush2.bf16.msra.mxu0 0
    %415 = vmatprep.subr.bf16.mxu0 0
    %416 = vmatpush2.bf16.msra.mxu0 0
    %417 = vmatprep.subr.bf16.mxu0 0
    %418 = vmatpush2.bf16.msra.mxu0 0
    %419 = vmatprep.subr.bf16.mxu0 0
    %420 = vmatpush2.bf16.msra.mxu0 0
    %421 = vmatprep.subr.bf16.mxu0 0
    %422 = vmatpush2.bf16.msra.mxu0 0
    %423 = vmatprep.subr.bf16.mxu0 0
    %424 = vmatpush2.bf16.msra.mxu0 0
    %425 = vmatprep.subr.bf16.mxu0 0
    %426 = vmatpush2.bf16.msra.mxu0 0
    %427 = vmatprep.mubr.bf16.mxu0 0
    %428 = vmatmul.mubr.bf16.gmra.mxu0 %v353
    %v429 = vpop.f32.mrf.mxu0
    %v430 = vadd.f32 0.0, %v429
    %v431 = vpop.f32.mrf.mxu0
    %v432 = vadd.f32 0.0, %v431
    %v433 = vpop.f32.mrf.mxu0
    %v434 = vpop.f32.mrf.mxu0
    %435 = vdwg.mxu0
    %v440 = vcombine.low %v389, %v391
    %v441 = vcombine.low %v430, %v432
    %v444 = vadd.f32 %v351, %v440
    %v445 = vadd.f32 %v352, %v441
    %v446 = vxor.u32 %v444, 2147483648
    %v447 = vmul.f32 %v446, 1.442695
    %v448 = vpow.pop %v447
    %v449 = vadd.f32 %v448, 1.0
    %v450 = vrcp.pop %v449
    %v451 = vmul.f32 1.0, %v450
    %v453 = vrot.slane %v444, 4
    %v455 = vxor.u32 %v453, 2147483648
    %v456 = vmul.f32 %v455, 1.442695
    %v457 = vpow.pop %v456
    %v458 = vadd.f32 %v457, 1.0
    %v459 = vrcp.pop %v458
    %v460 = vmul.f32 1.0, %v459
    %v461 = vtanh.pop %v445
    %v463 = vrot.slane %v445, 4
    %v465 = vxor.u32 %v463, 2147483648
    %v466 = vmul.f32 %v465, 1.442695
    %v467 = vpow.pop %v466
    %v468 = vadd.f32 %v467, 1.0
    %v469 = vrcp.pop %v468
    %v470 = vmul.f32 1.0, %v469
    %v471 = vmul.f32 %v460, %v347
    %v472 = vmul.f32 %v451, %v461
    %v473 = vadd.f32 %v471, %v472
    %v474 = vtanh.pop %v473
    %v475 = vmul.f32 %v470, %v474
    %s476 = scalar_lea.vmem %s0, 32
    %v477 = vld [vmem:[%s476] sm:$0xff]
    %v478 = vld [vmem:[%s476 + $0x8] sm:$0xff]
    %v479 = vpack.c.bf16 %v475, %v475
    %480 = vmatprep.subr.bf16.mxu0 %v193
    %481 = vmatpush1.bf16.msra.mxu0 %v192
    %482 = vmatprep.subr.bf16.mxu0 %v189
    %483 = vmatpush1.bf16.msra.mxu0 %v188
    %484 = vmatprep.subr.bf16.mxu0 %v185
    %485 = vmatpush1.bf16.msra.mxu0 %v184
    %486 = vmatprep.subr.bf16.mxu0 %v181
    %487 = vmatpush1.bf16.msra.mxu0 %v180
    %488 = vmatprep.subr.bf16.mxu0 %v177
    %489 = vmatpush1.bf16.msra.mxu0 %v176
    %490 = vmatprep.subr.bf16.mxu0 %v173
    %491 = vmatpush1.bf16.msra.mxu0 %v172
    %492 = vmatprep.subr.bf16.mxu0 %v169
    %493 = vmatpush1.bf16.msra.mxu0 %v168
    %494 = vmatprep.subr.bf16.mxu0 %v165
    %495 = vmatpush1.bf16.msra.mxu0 %v164
    %496 = vmatprep.subr.bf16.mxu0 0
    %497 = vmatpush2.bf16.msra.mxu0 0
    %498 = vmatprep.subr.bf16.mxu0 0
    %499 = vmatpush2.bf16.msra.mxu0 0
    %500 = vmatprep.subr.bf16.mxu0 0
    %501 = vmatpush2.bf16.msra.mxu0 0
    %502 = vmatprep.subr.bf16.mxu0 0
    %503 = vmatpush2.bf16.msra.mxu0 0
    %504 = vmatprep.subr.bf16.mxu0 0
    %505 = vmatpush2.bf16.msra.mxu0 0
    %506 = vmatprep.subr.bf16.mxu0 0
    %507 = vmatpush2.bf16.msra.mxu0 0
    %508 = vmatprep.subr.bf16.mxu0 0
    %509 = vmatpush2.bf16.msra.mxu0 0
    %510 = vmatprep.subr.bf16.mxu0 0
    %511 = vmatpush2.bf16.msra.mxu0 0
    %512 = vmatprep.mubr.bf16.mxu0 0
    %513 = vmatmul.mubr.bf16.gmra.mxu0 %v479
    %v514 = vpop.f32.mrf.mxu0
    %v515 = vadd.f32 0.0, %v514
    %v516 = vpop.f32.mrf.mxu0
    %v517 = vadd.f32 0.0, %v516
    %v518 = vpop.f32.mrf.mxu0
    %v519 = vpop.f32.mrf.mxu0
    %520 = vdwg.mxu0
    %521 = vmatprep.subr.bf16.mxu0 %v195
    %522 = vmatpush1.bf16.msra.mxu0 %v194
    %523 = vmatprep.subr.bf16.mxu0 %v191
    %524 = vmatpush1.bf16.msra.mxu0 %v190
    %525 = vmatprep.subr.bf16.mxu0 %v187
    %526 = vmatpush1.bf16.msra.mxu0 %v186
    %527 = vmatprep.subr.bf16.mxu0 %v183
    %528 = vmatpush1.bf16.msra.mxu0 %v182
    %529 = vmatprep.subr.bf16.mxu0 %v179
    %530 = vmatpush1.bf16.msra.mxu0 %v178
    %531 = vmatprep.subr.bf16.mxu0 %v175
    %532 = vmatpush1.bf16.msra.mxu0 %v174
    %533 = vmatprep.subr.bf16.mxu0 %v171
    %534 = vmatpush1.bf16.msra.mxu0 %v170
    %535 = vmatprep.subr.bf16.mxu0 %v167
    %536 = vmatpush1.bf16.msra.mxu0 %v166
    %537 = vmatprep.subr.bf16.mxu0 0
    %538 = vmatpush2.bf16.msra.mxu0 0
    %539 = vmatprep.subr.bf16.mxu0 0
    %540 = vmatpush2.bf16.msra.mxu0 0
    %541 = vmatprep.subr.bf16.mxu0 0
    %542 = vmatpush2.bf16.msra.mxu0 0
    %543 = vmatprep.subr.bf16.mxu0 0
    %544 = vmatpush2.bf16.msra.mxu0 0
    %545 = vmatprep.subr.bf16.mxu0 0
    %546 = vmatpush2.bf16.msra.mxu0 0
    %547 = vmatprep.subr.bf16.mxu0 0
    %548 = vmatpush2.bf16.msra.mxu0 0
    %549 = vmatprep.subr.bf16.mxu0 0
    %550 = vmatpush2.bf16.msra.mxu0 0
    %551 = vmatprep.subr.bf16.mxu0 0
    %552 = vmatpush2.bf16.msra.mxu0 0
    %553 = vmatprep.mubr.bf16.mxu0 0
    %554 = vmatmul.mubr.bf16.gmra.mxu0 %v479
    %v555 = vpop.f32.mrf.mxu0
    %v556 = vadd.f32 0.0, %v555
    %v557 = vpop.f32.mrf.mxu0
    %v558 = vadd.f32 0.0, %v557
    %v559 = vpop.f32.mrf.mxu0
    %v560 = vpop.f32.mrf.mxu0
    %561 = vdwg.mxu0
    %v566 = vcombine.low %v515, %v517
    %v567 = vcombine.low %v556, %v558
    %v570 = vadd.f32 %v477, %v566
    %v571 = vadd.f32 %v478, %v567
    %v572 = vxor.u32 %v570, 2147483648
    %v573 = vmul.f32 %v572, 1.442695
    %v574 = vpow.pop %v573
    %v575 = vadd.f32 %v574, 1.0
    %v576 = vrcp.pop %v575
    %v577 = vmul.f32 1.0, %v576
    %v579 = vrot.slane %v570, 4
    %v581 = vxor.u32 %v579, 2147483648
    %v582 = vmul.f32 %v581, 1.442695
    %v583 = vpow.pop %v582
    %v584 = vadd.f32 %v583, 1.0
    %v585 = vrcp.pop %v584
    %v586 = vmul.f32 1.0, %v585
    %v587 = vtanh.pop %v571
    %v589 = vrot.slane %v571, 4
    %v591 = vxor.u32 %v589, 2147483648
    %v592 = vmul.f32 %v591, 1.442695
    %v593 = vpow.pop %v592
    %v594 = vadd.f32 %v593, 1.0
    %v595 = vrcp.pop %v594
    %v596 = vmul.f32 1.0, %v595
    %v597 = vmul.f32 %v586, %v473
    %v598 = vmul.f32 %v577, %v587
    %v599 = vadd.f32 %v597, %v598
    %v600 = vtanh.pop %v599
    %v601 = vmul.f32 %v596, %v600
    %s602 = scalar_lea.vmem %s0, 48
    %v603 = vld [vmem:[%s602] sm:$0xff]
    %v604 = vld [vmem:[%s602 + $0x8] sm:$0xff]
    %v605 = vpack.c.bf16 %v601, %v601
    %606 = vmatprep.subr.bf16.mxu0 %v193
    %607 = vmatpush1.bf16.msra.mxu0 %v192
    %608 = vmatprep.subr.bf16.mxu0 %v189
    %609 = vmatpush1.bf16.msra.mxu0 %v188
    %610 = vmatprep.subr.bf16.mxu0 %v185
    %611 = vmatpush1.bf16.msra.mxu0 %v184
    %612 = vmatprep.subr.bf16.mxu0 %v181
    %613 = vmatpush1.bf16.msra.mxu0 %v180
    %614 = vmatprep.subr.bf16.mxu0 %v177
    %615 = vmatpush1.bf16.msra.mxu0 %v176
    %616 = vmatprep.subr.bf16.mxu0 %v173
    %617 = vmatpush1.bf16.msra.mxu0 %v172
    %618 = vmatprep.subr.bf16.mxu0 %v169
    %619 = vmatpush1.bf16.msra.mxu0 %v168
    %620 = vmatprep.subr.bf16.mxu0 %v165
    %621 = vmatpush1.bf16.msra.mxu0 %v164
    %622 = vmatprep.subr.bf16.mxu0 0
    %623 = vmatpush2.bf16.msra.mxu0 0
    %624 = vmatprep.subr.bf16.mxu0 0
    %625 = vmatpush2.bf16.msra.mxu0 0
    %626 = vmatprep.subr.bf16.mxu0 0
    %627 = vmatpush2.bf16.msra.mxu0 0
    %628 = vmatprep.subr.bf16.mxu0 0
    %629 = vmatpush2.bf16.msra.mxu0 0
    %630 = vmatprep.subr.bf16.mxu0 0
    %631 = vmatpush2.bf16.msra.mxu0 0
    %632 = vmatprep.subr.bf16.mxu0 0
    %633 = vmatpush2.bf16.msra.mxu0 0
    %634 = vmatprep.subr.bf16.mxu0 0
    %635 = vmatpush2.bf16.msra.mxu0 0
    %636 = vmatprep.subr.bf16.mxu0 0
    %637 = vmatpush2.bf16.msra.mxu0 0
    %638 = vmatprep.mubr.bf16.mxu0 0
    %639 = vmatmul.mubr.bf16.gmra.mxu0 %v605
    %v640 = vpop.f32.mrf.mxu0
    %v641 = vadd.f32 0.0, %v640
    %v642 = vpop.f32.mrf.mxu0
    %v643 = vadd.f32 0.0, %v642
    %v644 = vpop.f32.mrf.mxu0
    %v645 = vpop.f32.mrf.mxu0
    %646 = vdwg.mxu0
    %647 = vmatprep.subr.bf16.mxu0 %v195
    %648 = vmatpush1.bf16.msra.mxu0 %v194
    %649 = vmatprep.subr.bf16.mxu0 %v191
    %650 = vmatpush1.bf16.msra.mxu0 %v190
    %651 = vmatprep.subr.bf16.mxu0 %v187
    %652 = vmatpush1.bf16.msra.mxu0 %v186
    %653 = vmatprep.subr.bf16.mxu0 %v183
    %654 = vmatpush1.bf16.msra.mxu0 %v182
    %655 = vmatprep.subr.bf16.mxu0 %v179
    %656 = vmatpush1.bf16.msra.mxu0 %v178
    %657 = vmatprep.subr.bf16.mxu0 %v175
    %658 = vmatpush1.bf16.msra.mxu0 %v174
    %659 = vmatprep.subr.bf16.mxu0 %v171
    %660 = vmatpush1.bf16.msra.mxu0 %v170
    %661 = vmatprep.subr.bf16.mxu0 %v167
    %662 = vmatpush1.bf16.msra.mxu0 %v166
    %663 = vmatprep.subr.bf16.mxu0 0
    %664 = vmatpush2.bf16.msra.mxu0 0
    %665 = vmatprep.subr.bf16.mxu0 0
    %666 = vmatpush2.bf16.msra.mxu0 0
    %667 = vmatprep.subr.bf16.mxu0 0
    %668 = vmatpush2.bf16.msra.mxu0 0
    %669 = vmatprep.subr.bf16.mxu0 0
    %670 = vmatpush2.bf16.msra.mxu0 0
    %671 = vmatprep.subr.bf16.mxu0 0
    %672 = vmatpush2.bf16.msra.mxu0 0
    %673 = vmatprep.subr.bf16.mxu0 0
    %674 = vmatpush2.bf16.msra.mxu0 0
    %675 = vmatprep.subr.bf16.mxu0 0
    %676 = vmatpush2.bf16.msra.mxu0 0
    %677 = vmatprep.subr.bf16.mxu0 0
    %678 = vmatpush2.bf16.msra.mxu0 0
    %679 = vmatprep.mubr.bf16.mxu0 0
    %680 = vmatmul.mubr.bf16.gmra.mxu0 %v605
    %v681 = vpop.f32.mrf.mxu0
    %v682 = vadd.f32 0.0, %v681
    %v683 = vpop.f32.mrf.mxu0
    %v684 = vadd.f32 0.0, %v683
    %v685 = vpop.f32.mrf.mxu0
    %v686 = vpop.f32.mrf.mxu0
    %687 = vdwg.mxu0
    %v692 = vcombine.low %v641, %v643
    %v693 = vcombine.low %v682, %v684
    %v696 = vadd.f32 %v603, %v692
    %v697 = vadd.f32 %v604, %v693
    %v698 = vxor.u32 %v696, 2147483648
    %v699 = vmul.f32 %v698, 1.442695
    %v700 = vpow.pop %v699
    %v701 = vadd.f32 %v700, 1.0
    %v702 = vrcp.pop %v701
    %v703 = vmul.f32 1.0, %v702
    %v705 = vrot.slane %v696, 4
    %v707 = vxor.u32 %v705, 2147483648
    %v708 = vmul.f32 %v707, 1.442695
    %v709 = vpow.pop %v708
    %v710 = vadd.f32 %v709, 1.0
    %v711 = vrcp.pop %v710
    %v712 = vmul.f32 1.0, %v711
    %v713 = vtanh.pop %v697
    %v715 = vrot.slane %v697, 4
    %v717 = vxor.u32 %v715, 2147483648
    %v718 = vmul.f32 %v717, 1.442695
    %v719 = vpow.pop %v718
    %v720 = vadd.f32 %v719, 1.0
    %v721 = vrcp.pop %v720
    %v722 = vmul.f32 1.0, %v721
    %v723 = vmul.f32 %v712, %v599
    %v724 = vmul.f32 %v703, %v713
    %v725 = vadd.f32 %v723, %v724
    %v726 = vtanh.pop %v725
    %v727 = vmul.f32 %v722, %v726
    %s728 = scalar_lea.vmem %s0, 64
    %v729 = vld [vmem:[%s728] sm:$0xff]
    %v730 = vld [vmem:[%s728 + $0x8] sm:$0xff]
    %v731 = vpack.c.bf16 %v727, %v727
    %732 = vmatprep.subr.bf16.mxu0 %v193
    %733 = vmatpush1.bf16.msra.mxu0 %v192
    %734 = vmatprep.subr.bf16.mxu0 %v189
    %735 = vmatpush1.bf16.msra.mxu0 %v188
    %736 = vmatprep.subr.bf16.mxu0 %v185
    %737 = vmatpush1.bf16.msra.mxu0 %v184
    %738 = vmatprep.subr.bf16.mxu0 %v181
    %739 = vmatpush1.bf16.msra.mxu0 %v180
    %740 = vmatprep.subr.bf16.mxu0 %v177
    %741 = vmatpush1.bf16.msra.mxu0 %v176
    %742 = vmatprep.subr.bf16.mxu0 %v173
    %743 = vmatpush1.bf16.msra.mxu0 %v172
    %744 = vmatprep.subr.bf16.mxu0 %v169
    %745 = vmatpush1.bf16.msra.mxu0 %v168
    %746 = vmatprep.subr.bf16.mxu0 %v165
    %747 = vmatpush1.bf16.msra.mxu0 %v164
    %748 = vmatprep.subr.bf16.mxu0 0
    %749 = vmatpush2.bf16.msra.mxu0 0
    %750 = vmatprep.subr.bf16.mxu0 0
    %751 = vmatpush2.bf16.msra.mxu0 0
    %752 = vmatprep.subr.bf16.mxu0 0
    %753 = vmatpush2.bf16.msra.mxu0 0
    %754 = vmatprep.subr.bf16.mxu0 0
    %755 = vmatpush2.bf16.msra.mxu0 0
    %756 = vmatprep.subr.bf16.mxu0 0
    %757 = vmatpush2.bf16.msra.mxu0 0
    %758 = vmatprep.subr.bf16.mxu0 0
    %759 = vmatpush2.bf16.msra.mxu0 0
    %760 = vmatprep.subr.bf16.mxu0 0
    %761 = vmatpush2.bf16.msra.mxu0 0
    %762 = vmatprep.subr.bf16.mxu0 0
    %763 = vmatpush2.bf16.msra.mxu0 0
    %764 = vmatprep.mubr.bf16.mxu0 0
    %765 = vmatmul.mubr.bf16.gmra.mxu0 %v731
    %v766 = vpop.f32.mrf.mxu0
    %v767 = vadd.f32 0.0, %v766
    %v768 = vpop.f32.mrf.mxu0
    %v769 = vadd.f32 0.0, %v768
    %v770 = vpop.f32.mrf.mxu0
    %v771 = vpop.f32.mrf.mxu0
    %772 = vdwg.mxu0
    %773 = vmatprep.subr.bf16.mxu0 %v195
    %774 = vmatpush1.bf16.msra.mxu0 %v194
    %775 = vmatprep.subr.bf16.mxu0 %v191
    %776 = vmatpush1.bf16.msra.mxu0 %v190
    %777 = vmatprep.subr.bf16.mxu0 %v187
    %778 = vmatpush1.bf16.msra.mxu0 %v186
    %779 = vmatprep.subr.bf16.mxu0 %v183
    %780 = vmatpush1.bf16.msra.mxu0 %v182
    %781 = vmatprep.subr.bf16.mxu0 %v179
    %782 = vmatpush1.bf16.msra.mxu0 %v178
    %783 = vmatprep.subr.bf16.mxu0 %v175
    %784 = vmatpush1.bf16.msra.mxu0 %v174
    %785 = vmatprep.subr.bf16.mxu0 %v171
    %786 = vmatpush1.bf16.msra.mxu0 %v170
    %787 = vmatprep.subr.bf16.mxu0 %v167
    %788 = vmatpush1.bf16.msra.mxu0 %v166
    %789 = vmatprep.subr.bf16.mxu0 0
    %790 = vmatpush2.bf16.msra.mxu0 0
    %791 = vmatprep.subr.bf16.mxu0 0
    %792 = vmatpush2.bf16.msra.mxu0 0
    %793 = vmatprep.subr.bf16.mxu0 0
    %794 = vmatpush2.bf16.msra.mxu0 0
    %795 = vmatprep.subr.bf16.mxu0 0
    %796 = vmatpush2.bf16.msra.mxu0 0
    %797 = vmatprep.subr.bf16.mxu0 0
    %798 = vmatpush2.bf16.msra.mxu0 0
    %799 = vmatprep.subr.bf16.mxu0 0
    %800 = vmatpush2.bf16.msra.mxu0 0
    %801 = vmatprep.subr.bf16.mxu0 0
    %802 = vmatpush2.bf16.msra.mxu0 0
    %803 = vmatprep.subr.bf16.mxu0 0
    %804 = vmatpush2.bf16.msra.mxu0 0
    %805 = vmatprep.mubr.bf16.mxu0 0
    %806 = vmatmul.mubr.bf16.gmra.mxu0 %v731
    %v807 = vpop.f32.mrf.mxu0
    %v808 = vadd.f32 0.0, %v807
    %v809 = vpop.f32.mrf.mxu0
    %v810 = vadd.f32 0.0, %v809
    %v811 = vpop.f32.mrf.mxu0
    %v812 = vpop.f32.mrf.mxu0
    %813 = vdwg.mxu0
    %v818 = vcombine.low %v767, %v769
    %v819 = vcombine.low %v808, %v810
    %v822 = vadd.f32 %v729, %v818
    %v823 = vadd.f32 %v730, %v819
    %v824 = vxor.u32 %v822, 2147483648
    %v825 = vmul.f32 %v824, 1.442695
    %v826 = vpow.pop %v825
    %v827 = vadd.f32 %v826, 1.0
    %v828 = vrcp.pop %v827
    %v829 = vmul.f32 1.0, %v828
    %v831 = vrot.slane %v822, 4
    %v833 = vxor.u32 %v831, 2147483648
    %v834 = vmul.f32 %v833, 1.442695
    %v835 = vpow.pop %v834
    %v836 = vadd.f32 %v835, 1.0
    %v837 = vrcp.pop %v836
    %v838 = vmul.f32 1.0, %v837
    %v839 = vtanh.pop %v823
    %v841 = vrot.slane %v823, 4
    %v843 = vxor.u32 %v841, 2147483648
    %v844 = vmul.f32 %v843, 1.442695
    %v845 = vpow.pop %v844
    %v846 = vadd.f32 %v845, 1.0
    %v847 = vrcp.pop %v846
    %v848 = vmul.f32 1.0, %v847
    %v849 = vmul.f32 %v838, %v725
    %v850 = vmul.f32 %v829, %v839
    %v851 = vadd.f32 %v849, %v850
    %v852 = vtanh.pop %v851
    %v853 = vmul.f32 %v848, %v852
    %s854 = scalar_lea.vmem %s0, 80
    %v855 = vld [vmem:[%s854] sm:$0xff]
    %v856 = vld [vmem:[%s854 + $0x8] sm:$0xff]
    %v857 = vpack.c.bf16 %v853, %v853
    %858 = vmatprep.subr.bf16.mxu0 %v193
    %859 = vmatpush1.bf16.msra.mxu0 %v192
    %860 = vmatprep.subr.bf16.mxu0 %v189
    %861 = vmatpush1.bf16.msra.mxu0 %v188
    %862 = vmatprep.subr.bf16.mxu0 %v185
    %863 = vmatpush1.bf16.msra.mxu0 %v184
    %864 = vmatprep.subr.bf16.mxu0 %v181
    %865 = vmatpush1.bf16.msra.mxu0 %v180
    %866 = vmatprep.subr.bf16.mxu0 %v177
    %867 = vmatpush1.bf16.msra.mxu0 %v176
    %868 = vmatprep.subr.bf16.mxu0 %v173
    %869 = vmatpush1.bf16.msra.mxu0 %v172
    %870 = vmatprep.subr.bf16.mxu0 %v169
    %871 = vmatpush1.bf16.msra.mxu0 %v168
    %872 = vmatprep.subr.bf16.mxu0 %v165
    %873 = vmatpush1.bf16.msra.mxu0 %v164
    %874 = vmatprep.subr.bf16.mxu0 0
    %875 = vmatpush2.bf16.msra.mxu0 0
    %876 = vmatprep.subr.bf16.mxu0 0
    %877 = vmatpush2.bf16.msra.mxu0 0
    %878 = vmatprep.subr.bf16.mxu0 0
    %879 = vmatpush2.bf16.msra.mxu0 0
    %880 = vmatprep.subr.bf16.mxu0 0
    %881 = vmatpush2.bf16.msra.mxu0 0
    %882 = vmatprep.subr.bf16.mxu0 0
    %883 = vmatpush2.bf16.msra.mxu0 0
    %884 = vmatprep.subr.bf16.mxu0 0
    %885 = vmatpush2.bf16.msra.mxu0 0
    %886 = vmatprep.subr.bf16.mxu0 0
    %887 = vmatpush2.bf16.msra.mxu0 0
    %888 = vmatprep.subr.bf16.mxu0 0
    %889 = vmatpush2.bf16.msra.mxu0 0
    %890 = vmatprep.mubr.bf16.mxu0 0
    %891 = vmatmul.mubr.bf16.gmra.mxu0 %v857
    %v892 = vpop.f32.mrf.mxu0
    %v893 = vadd.f32 0.0, %v892
    %v894 = vpop.f32.mrf.mxu0
    %v895 = vadd.f32 0.0, %v894
    %v896 = vpop.f32.mrf.mxu0
    %v897 = vpop.f32.mrf.mxu0
    %898 = vdwg.mxu0
    %899 = vmatprep.subr.bf16.mxu0 %v195
    %900 = vmatpush1.bf16.msra.mxu0 %v194
    %901 = vmatprep.subr.bf16.mxu0 %v191
    %902 = vmatpush1.bf16.msra.mxu0 %v190
    %903 = vmatprep.subr.bf16.mxu0 %v187
    %904 = vmatpush1.bf16.msra.mxu0 %v186
    %905 = vmatprep.subr.bf16.mxu0 %v183
    %906 = vmatpush1.bf16.msra.mxu0 %v182
    %907 = vmatprep.subr.bf16.mxu0 %v179
    %908 = vmatpush1.bf16.msra.mxu0 %v178
    %909 = vmatprep.subr.bf16.mxu0 %v175
    %910 = vmatpush1.bf16.msra.mxu0 %v174
    %911 = vmatprep.subr.bf16.mxu0 %v171
    %912 = vmatpush1.bf16.msra.mxu0 %v170
    %913 = vmatprep.subr.bf16.mxu0 %v167
    %914 = vmatpush1.bf16.msra.mxu0 %v166
    %915 = vmatprep.subr.bf16.mxu0 0
    %916 = vmatpush2.bf16.msra.mxu0 0
    %917 = vmatprep.subr.bf16.mxu0 0
    %918 = vmatpush2.bf16.msra.mxu0 0
    %919 = vmatprep.subr.bf16.mxu0 0
    %920 = vmatpush2.bf16.msra.mxu0 0
    %921 = vmatprep.subr.bf16.mxu0 0
    %922 = vmatpush2.bf16.msra.mxu0 0
    %923 = vmatprep.subr.bf16.mxu0 0
    %924 = vmatpush2.bf16.msra.mxu0 0
    %925 = vmatprep.subr.bf16.mxu0 0
    %926 = vmatpush2.bf16.msra.mxu0 0
    %927 = vmatprep.subr.bf16.mxu0 0
    %928 = vmatpush2.bf16.msra.mxu0 0
    %929 = vmatprep.subr.bf16.mxu0 0
    %930 = vmatpush2.bf16.msra.mxu0 0
    %931 = vmatprep.mubr.bf16.mxu0 0
    %932 = vmatmul.mubr.bf16.gmra.mxu0 %v857
    %v933 = vpop.f32.mrf.mxu0
    %v934 = vadd.f32 0.0, %v933
    %v935 = vpop.f32.mrf.mxu0
    %v936 = vadd.f32 0.0, %v935
    %v937 = vpop.f32.mrf.mxu0
    %v938 = vpop.f32.mrf.mxu0
    %939 = vdwg.mxu0
    %v944 = vcombine.low %v893, %v895
    %v945 = vcombine.low %v934, %v936
    %v948 = vadd.f32 %v855, %v944
    %v949 = vadd.f32 %v856, %v945
    %v950 = vxor.u32 %v948, 2147483648
    %v951 = vmul.f32 %v950, 1.442695
    %v952 = vpow.pop %v951
    %v953 = vadd.f32 %v952, 1.0
    %v954 = vrcp.pop %v953
    %v955 = vmul.f32 1.0, %v954
    %v957 = vrot.slane %v948, 4
    %v959 = vxor.u32 %v957, 2147483648
    %v960 = vmul.f32 %v959, 1.442695
    %v961 = vpow.pop %v960
    %v962 = vadd.f32 %v961, 1.0
    %v963 = vrcp.pop %v962
    %v964 = vmul.f32 1.0, %v963
    %v965 = vtanh.pop %v949
    %v967 = vrot.slane %v949, 4
    %v969 = vxor.u32 %v967, 2147483648
    %v970 = vmul.f32 %v969, 1.442695
    %v971 = vpow.pop %v970
    %v972 = vadd.f32 %v971, 1.0
    %v973 = vrcp.pop %v972
    %v974 = vmul.f32 1.0, %v973
    %v975 = vmul.f32 %v964, %v851
    %v976 = vmul.f32 %v955, %v965
    %v977 = vadd.f32 %v975, %v976
    %v978 = vtanh.pop %v977
    %v979 = vmul.f32 %v974, %v978
    %s980 = scalar_lea.vmem %s0, 96
    %v981 = vld [vmem:[%s980] sm:$0xff]
    %v982 = vld [vmem:[%s980 + $0x8] sm:$0xff]
    %v983 = vpack.c.bf16 %v979, %v979
    %984 = vmatprep.subr.bf16.mxu0 %v193
    %985 = vmatpush1.bf16.msra.mxu0 %v192
    %986 = vmatprep.subr.bf16.mxu0 %v189
    %987 = vmatpush1.bf16.msra.mxu0 %v188
    %988 = vmatprep.subr.bf16.mxu0 %v185
    %989 = vmatpush1.bf16.msra.mxu0 %v184
    %990 = vmatprep.subr.bf16.mxu0 %v181
    %991 = vmatpush1.bf16.msra.mxu0 %v180
    %992 = vmatprep.subr.bf16.mxu0 %v177
    %993 = vmatpush1.bf16.msra.mxu0 %v176
    %994 = vmatprep.subr.bf16.mxu0 %v173
    %995 = vmatpush1.bf16.msra.mxu0 %v172
    %996 = vmatprep.subr.bf16.mxu0 %v169
    %997 = vmatpush1.bf16.msra.mxu0 %v168
    %998 = vmatprep.subr.bf16.mxu0 %v165
    %999 = vmatpush1.bf16.msra.mxu0 %v164
    %1000 = vmatprep.subr.bf16.mxu0 0
    %1001 = vmatpush2.bf16.msra.mxu0 0
    %1002 = vmatprep.subr.bf16.mxu0 0
    %1003 = vmatpush2.bf16.msra.mxu0 0
    %1004 = vmatprep.subr.bf16.mxu0 0
    %1005 = vmatpush2.bf16.msra.mxu0 0
    %1006 = vmatprep.subr.bf16.mxu0 0
    %1007 = vmatpush2.bf16.msra.mxu0 0
    %1008 = vmatprep.subr.bf16.mxu0 0
    %1009 = vmatpush2.bf16.msra.mxu0 0
    %1010 = vmatprep.subr.bf16.mxu0 0
    %1011 = vmatpush2.bf16.msra.mxu0 0
    %1012 = vmatprep.subr.bf16.mxu0 0
    %1013 = vmatpush2.bf16.msra.mxu0 0
    %1014 = vmatprep.subr.bf16.mxu0 0
    %1015 = vmatpush2.bf16.msra.mxu0 0
    %1016 = vmatprep.mubr.bf16.mxu0 0
    %1017 = vmatmul.mubr.bf16.gmra.mxu0 %v983
    %v1018 = vpop.f32.mrf.mxu0
    %v1019 = vadd.f32 0.0, %v1018
    %v1020 = vpop.f32.mrf.mxu0
    %v1021 = vadd.f32 0.0, %v1020
    %v1022 = vpop.f32.mrf.mxu0
    %v1023 = vpop.f32.mrf.mxu0
    %1024 = vdwg.mxu0
    %1025 = vmatprep.subr.bf16.mxu0 %v195
    %1026 = vmatpush1.bf16.msra.mxu0 %v194
    %1027 = vmatprep.subr.bf16.mxu0 %v191
    %1028 = vmatpush1.bf16.msra.mxu0 %v190
    %1029 = vmatprep.subr.bf16.mxu0 %v187
    %1030 = vmatpush1.bf16.msra.mxu0 %v186
    %1031 = vmatprep.subr.bf16.mxu0 %v183
    %1032 = vmatpush1.bf16.msra.mxu0 %v182
    %1033 = vmatprep.subr.bf16.mxu0 %v179
    %1034 = vmatpush1.bf16.msra.mxu0 %v178
    %1035 = vmatprep.subr.bf16.mxu0 %v175
    %1036 = vmatpush1.bf16.msra.mxu0 %v174
    %1037 = vmatprep.subr.bf16.mxu0 %v171
    %1038 = vmatpush1.bf16.msra.mxu0 %v170
    %1039 = vmatprep.subr.bf16.mxu0 %v167
    %1040 = vmatpush1.bf16.msra.mxu0 %v166
    %1041 = vmatprep.subr.bf16.mxu0 0
    %1042 = vmatpush2.bf16.msra.mxu0 0
    %1043 = vmatprep.subr.bf16.mxu0 0
    %1044 = vmatpush2.bf16.msra.mxu0 0
    %1045 = vmatprep.subr.bf16.mxu0 0
    %1046 = vmatpush2.bf16.msra.mxu0 0
    %1047 = vmatprep.subr.bf16.mxu0 0
    %1048 = vmatpush2.bf16.msra.mxu0 0
    %1049 = vmatprep.subr.bf16.mxu0 0
    %1050 = vmatpush2.bf16.msra.mxu0 0
    %1051 = vmatprep.subr.bf16.mxu0 0
    %1052 = vmatpush2.bf16.msra.mxu0 0
    %1053 = vmatprep.subr.bf16.mxu0 0
    %1054 = vmatpush2.bf16.msra.mxu0 0
    %1055 = vmatprep.subr.bf16.mxu0 0
    %1056 = vmatpush2.bf16.msra.mxu0 0
    %1057 = vmatprep.mubr.bf16.mxu0 0
    %1058 = vmatmul.mubr.bf16.gmra.mxu0 %v983
    %v1059 = vpop.f32.mrf.mxu0
    %v1060 = vadd.f32 0.0, %v1059
    %v1061 = vpop.f32.mrf.mxu0
    %v1062 = vadd.f32 0.0, %v1061
    %v1063 = vpop.f32.mrf.mxu0
    %v1064 = vpop.f32.mrf.mxu0
    %1065 = vdwg.mxu0
    %v1070 = vcombine.low %v1019, %v1021
    %v1071 = vcombine.low %v1060, %v1062
    %v1074 = vadd.f32 %v981, %v1070
    %v1075 = vadd.f32 %v982, %v1071
    %v1076 = vxor.u32 %v1074, 2147483648
    %v1077 = vmul.f32 %v1076, 1.442695
    %v1078 = vpow.pop %v1077
    %v1079 = vadd.f32 %v1078, 1.0
    %v1080 = vrcp.pop %v1079
    %v1081 = vmul.f32 1.0, %v1080
    %v1083 = vrot.slane %v1074, 4
    %v1085 = vxor.u32 %v1083, 2147483648
    %v1086 = vmul.f32 %v1085, 1.442695
    %v1087 = vpow.pop %v1086
    %v1088 = vadd.f32 %v1087, 1.0
    %v1089 = vrcp.pop %v1088
    %v1090 = vmul.f32 1.0, %v1089
    %v1091 = vtanh.pop %v1075
    %v1093 = vrot.slane %v1075, 4
    %v1095 = vxor.u32 %v1093, 2147483648
    %v1096 = vmul.f32 %v1095, 1.442695
    %v1097 = vpow.pop %v1096
    %v1098 = vadd.f32 %v1097, 1.0
    %v1099 = vrcp.pop %v1098
    %v1100 = vmul.f32 1.0, %v1099
    %v1101 = vmul.f32 %v1090, %v977
    %v1102 = vmul.f32 %v1081, %v1091
    %v1103 = vadd.f32 %v1101, %v1102
    %v1104 = vtanh.pop %v1103
    %v1105 = vmul.f32 %v1100, %v1104
    %s1106 = scalar_lea.vmem %s0, 112
    %v1107 = vld [vmem:[%s1106] sm:$0xff]
    %v1108 = vld [vmem:[%s1106 + $0x8] sm:$0xff]
    %v1109 = vpack.c.bf16 %v1105, %v1105
    %1110 = vmatprep.subr.bf16.mxu0 %v193
    %1111 = vmatpush1.bf16.msra.mxu0 %v192
    %1112 = vmatprep.subr.bf16.mxu0 %v189
    %1113 = vmatpush1.bf16.msra.mxu0 %v188
    %1114 = vmatprep.subr.bf16.mxu0 %v185
    %1115 = vmatpush1.bf16.msra.mxu0 %v184
    %1116 = vmatprep.subr.bf16.mxu0 %v181
    %1117 = vmatpush1.bf16.msra.mxu0 %v180
    %1118 = vmatprep.subr.bf16.mxu0 %v177
    %1119 = vmatpush1.bf16.msra.mxu0 %v176
    %1120 = vmatprep.subr.bf16.mxu0 %v173
    %1121 = vmatpush1.bf16.msra.mxu0 %v172
    %1122 = vmatprep.subr.bf16.mxu0 %v169
    %1123 = vmatpush1.bf16.msra.mxu0 %v168
    %1124 = vmatprep.subr.bf16.mxu0 %v165
    %1125 = vmatpush1.bf16.msra.mxu0 %v164
    %1126 = vmatprep.subr.bf16.mxu0 0
    %1127 = vmatpush2.bf16.msra.mxu0 0
    %1128 = vmatprep.subr.bf16.mxu0 0
    %1129 = vmatpush2.bf16.msra.mxu0 0
    %1130 = vmatprep.subr.bf16.mxu0 0
    %1131 = vmatpush2.bf16.msra.mxu0 0
    %1132 = vmatprep.subr.bf16.mxu0 0
    %1133 = vmatpush2.bf16.msra.mxu0 0
    %1134 = vmatprep.subr.bf16.mxu0 0
    %1135 = vmatpush2.bf16.msra.mxu0 0
    %1136 = vmatprep.subr.bf16.mxu0 0
    %1137 = vmatpush2.bf16.msra.mxu0 0
    %1138 = vmatprep.subr.bf16.mxu0 0
    %1139 = vmatpush2.bf16.msra.mxu0 0
    %1140 = vmatprep.subr.bf16.mxu0 0
    %1141 = vmatpush2.bf16.msra.mxu0 0
    %1142 = vmatprep.mubr.bf16.mxu0 0
    %1143 = vmatmul.mubr.bf16.gmra.mxu0 %v1109
    %v1144 = vpop.f32.mrf.mxu0
    %v1145 = vadd.f32 0.0, %v1144
    %v1146 = vpop.f32.mrf.mxu0
    %v1147 = vadd.f32 0.0, %v1146
    %v1148 = vpop.f32.mrf.mxu0
    %v1149 = vpop.f32.mrf.mxu0
    %1150 = vdwg.mxu0
    %1151 = vmatprep.subr.bf16.mxu0 %v195
    %1152 = vmatpush1.bf16.msra.mxu0 %v194
    %1153 = vmatprep.subr.bf16.mxu0 %v191
    %1154 = vmatpush1.bf16.msra.mxu0 %v190
    %1155 = vmatprep.subr.bf16.mxu0 %v187
    %1156 = vmatpush1.bf16.msra.mxu0 %v186
    %1157 = vmatprep.subr.bf16.mxu0 %v183
    %1158 = vmatpush1.bf16.msra.mxu0 %v182
    %1159 = vmatprep.subr.bf16.mxu0 %v179
    %1160 = vmatpush1.bf16.msra.mxu0 %v178
    %1161 = vmatprep.subr.bf16.mxu0 %v175
    %1162 = vmatpush1.bf16.msra.mxu0 %v174
    %1163 = vmatprep.subr.bf16.mxu0 %v171
    %1164 = vmatpush1.bf16.msra.mxu0 %v170
    %1165 = vmatprep.subr.bf16.mxu0 %v167
    %1166 = vmatpush1.bf16.msra.mxu0 %v166
    %1167 = vmatprep.subr.bf16.mxu0 0
    %1168 = vmatpush2.bf16.msra.mxu0 0
    %1169 = vmatprep.subr.bf16.mxu0 0
    %1170 = vmatpush2.bf16.msra.mxu0 0
    %1171 = vmatprep.subr.bf16.mxu0 0
    %1172 = vmatpush2.bf16.msra.mxu0 0
    %1173 = vmatprep.subr.bf16.mxu0 0
    %1174 = vmatpush2.bf16.msra.mxu0 0
    %1175 = vmatprep.subr.bf16.mxu0 0
    %1176 = vmatpush2.bf16.msra.mxu0 0
    %1177 = vmatprep.subr.bf16.mxu0 0
    %1178 = vmatpush2.bf16.msra.mxu0 0
    %1179 = vmatprep.subr.bf16.mxu0 0
    %1180 = vmatpush2.bf16.msra.mxu0 0
    %1181 = vmatprep.subr.bf16.mxu0 0
    %1182 = vmatpush2.bf16.msra.mxu0 0
    %1183 = vmatprep.mubr.bf16.mxu0 0
    %1184 = vmatmul.mubr.bf16.gmra.mxu0 %v1109
    %v1185 = vpop.f32.mrf.mxu0
    %v1186 = vadd.f32 0.0, %v1185
    %v1187 = vpop.f32.mrf.mxu0
    %v1188 = vadd.f32 0.0, %v1187
    %v1189 = vpop.f32.mrf.mxu0
    %v1190 = vpop.f32.mrf.mxu0
    %1191 = vdwg.mxu0
    %v1196 = vcombine.low %v1145, %v1147
    %v1197 = vcombine.low %v1186, %v1188
    %v1200 = vadd.f32 %v1107, %v1196
    %v1201 = vadd.f32 %v1108, %v1197
    %v1202 = vxor.u32 %v1200, 2147483648
    %v1203 = vmul.f32 %v1202, 1.442695
    %v1204 = vpow.pop %v1203
    %v1205 = vadd.f32 %v1204, 1.0
    %v1206 = vrcp.pop %v1205
    %v1207 = vmul.f32 1.0, %v1206
    %v1209 = vrot.slane %v1200, 4
    %v1211 = vxor.u32 %v1209, 2147483648
    %v1212 = vmul.f32 %v1211, 1.442695
    %v1213 = vpow.pop %v1212
    %v1214 = vadd.f32 %v1213, 1.0
    %v1215 = vrcp.pop %v1214
    %v1216 = vmul.f32 1.0, %v1215
    %v1217 = vtanh.pop %v1201
    %v1219 = vrot.slane %v1201, 4
    %v1221 = vxor.u32 %v1219, 2147483648
    %v1222 = vmul.f32 %v1221, 1.442695
    %v1223 = vpow.pop %v1222
    %v1224 = vadd.f32 %v1223, 1.0
    %v1225 = vrcp.pop %v1224
    %v1226 = vmul.f32 1.0, %v1225
    %v1227 = vmul.f32 %v1216, %v1103
    %v1228 = vmul.f32 %v1207, %v1217
    %v1229 = vadd.f32 %v1227, %v1228
    %v1230 = vtanh.pop %v1229
    %v1231 = vmul.f32 %v1226, %v1230
    %1232 = vst [vmem:[#allocation2] sm:$0xf] %v1231
    %1233 = vst [vmem:[#allocation3] sm:$0xf] %v1229
    // Predicated region
    $region30: #{piano_roll_lstm_forward.3} parent=1 // pred_check
      %p1234 = pneg %p25
    $region31: #{piano_roll_lstm_forward.3} parent=1 // pred_check_branch
      %1236 = sbr.rel (%p1234) target = $region33
    $region32: #{piano_roll_lstm_forward.3} parent=1 // pred_region
      %vm1237 = vcmask 1043456
      %v1238 = vsel %vm1237, %v1231, 0.0
      %v1239 = vrot.slane %v1238, 4
      %v1240 = vadd.f32 %v1238, %v1239
      %v1241 = vrot.slane %v1240, 2
      %v1242 = vadd.f32 %v1240, %v1241
      %v1243 = vrot.slane %v1242, 1
      %v1244 = vadd.f32 %v1242, %v1243
      %v1245 = vrcp.pop 4.0
      %v1246 = vmul.f32 %v1244, %v1245
      %v1247 = vsub.f32 %v1231, %v1246
      %v1248 = vmul.f32 %v1247, %v1247
      %v1249 = vsel %vm1237, %v1248, 0.0
      %v1250 = vrot.slane %v1249, 4
      %v1251 = vadd.f32 %v1249, %v1250
      %v1252 = vrot.slane %v1251, 2
      %v1253 = vadd.f32 %v1251, %v1252
      %v1254 = vrot.slane %v1253, 1
      %v1255 = vadd.f32 %v1253, %v1254
      %v1256 = vmul.f32 %v1255, %v1245
      %v1257 = vadd.f32 %v1256, 1e-05
      %v1258 = vrsqrt.pop %v1257
      %v1259 = vmul.f32 %v1247, %v1258
      %v1260 = vld [vmem:[%s2] sm:$0x1]
      %v1262 = vlaneseq
      %v1263 = vshrl.u32 %v1262, 7
      %v1264 = vsub.s32 0, %v1263
      %v1265 = vrot.slane %v1260, %v1264
      %v1267 = vmul.f32 %v1259, %v1265
      %v1268 = vld [vmem:[%s3] sm:$0x1]
      %v1270 = vlaneseq
      %v1271 = vshrl.u32 %v1270, 7
      %v1272 = vsub.s32 0, %v1271
      %v1273 = vrot.slane %v1268, %v1272
      %v1275 = vadd.f32 %v1267, %v1273
      %v1276 = vpack.c.bf16 %v1275, %v1275
      %v1277 = vld [vmem:[%s4] sm:$0xf]
      %v1278 = vld [vmem:[%s4 + $0x4] sm:$0xf]
      %v1279 = vld [vmem:[%s4 + $0x8] sm:$0xf]
      %v1280 = vld [vmem:[%s4 + $0xc] sm:$0xf]
      %v1281 = vld [vmem:[%s4 + $0x10] sm:$0xf]
      %v1282 = vld [vmem:[%s4 + $0x14] sm:$0xf]
      %v1283 = vld [vmem:[%s4 + $0x18] sm:$0xf]
      %v1284 = vld [vmem:[%s4 + $0x1c] sm:$0xf]
      %v1285 = vld [vmem:[%s4 + $0x20] sm:$0xf]
      %v1286 = vld [vmem:[%s4 + $0x24] sm:$0xf]
      %v1287 = vld [vmem:[%s4 + $0x28] sm:$0xf]
      %v1288 = vld [vmem:[%s4 + $0x2c] sm:$0xf]
      %v1289 = vld [vmem:[%s4 + $0x30] sm:$0xf]
      %v1290 = vld [vmem:[%s4 + $0x34] sm:$0xf]
      %v1291 = vld [vmem:[%s4 + $0x38] sm:$0xf]
      %v1292 = vld [vmem:[%s4 + $0x3c] sm:$0xf]
      %v1293 = vld [vmem:[%s5] sm:$0x1]
      %v1295 = vlaneseq
      %v1296 = vshrl.u32 %v1295, 7
      %v1297 = vsub.s32 0, %v1296
      %v1298 = vrot.slane %v1293, %v1297
      %v1316 = vunpack.c.l.b16 %v1277
      %v1317 = vunpack.c.l.b16 %v1278
      %v1318 = vunpack.c.l.b16 %v1279
      %v1319 = vunpack.c.l.b16 %v1280
      %v1320 = vunpack.c.l.b16 %v1281
      %v1321 = vunpack.c.l.b16 %v1282
      %v1322 = vunpack.c.l.b16 %v1283
      %v1323 = vunpack.c.l.b16 %v1284
      %v1324 = vunpack.c.l.b16 %v1285
      %v1325 = vunpack.c.l.b16 %v1286
      %v1326 = vunpack.c.l.b16 %v1287
      %v1327 = vunpack.c.l.b16 %v1288
      %v1328 = vunpack.c.l.b16 %v1289
      %v1329 = vunpack.c.l.b16 %v1290
      %v1330 = vunpack.c.l.b16 %v1291
      %v1331 = vunpack.c.l.b16 %v1292
      %v1332 = vpack.c.b16 %v1317, %v1316
      %v1333 = vpack.c.b16 %v1319, %v1318
      %v1334 = vpack.c.b16 %v1321, %v1320
      %v1335 = vpack.c.b16 %v1323, %v1322
      %v1336 = vpack.c.b16 %v1325, %v1324
      %v1337 = vpack.c.b16 %v1327, %v1326
      %v1338 = vpack.c.b16 %v1329, %v1328
      %v1339 = vpack.c.b16 %v1331, %v1330
      %1348 = vmatprep.subr.bf16.mxu0 0
      %1349 = vmatpush1.bf16.msra.mxu0 %v1339
      %1350 = vmatprep.subr.bf16.mxu0 0
      %1351 = vmatpush1.bf16.msra.mxu0 %v1338
      %1352 = vmatprep.subr.bf16.mxu0 0
      %1353 = vmatpush1.bf16.msra.mxu0 %v1337
      %1354 = vmatprep.subr.bf16.mxu0 0
      %1355 = vmatpush1.bf16.msra.mxu0 %v1336
      %1356 = vmatprep.subr.bf16.mxu0 0
      %1357 = vmatpush1.bf16.msra.mxu0 %v1335
      %1358 = vmatprep.subr.bf16.mxu0 0
      %1359 = vmatpush1.bf16.msra.mxu0 %v1334
      %1360 = vmatprep.subr.bf16.mxu0 0
      %1361 = vmatpush1.bf16.msra.mxu0 %v1333
      %1362 = vmatprep.subr.bf16.mxu0 0
      %1363 = vmatpush1.bf16.msra.mxu0 %v1332
      %1364 = vmatprep.subr.bf16.mxu0 0
      %1365 = vmatpush2.bf16.msra.mxu0 0
      %1366 = vmatprep.subr.bf16.mxu0 0
      %1367 = vmatpush2.bf16.msra.mxu0 0
      %1368 = vmatprep.subr.bf16.mxu0 0
      %1369 = vmatpush2.bf16.msra.mxu0 0
      %1370 = vmatprep.subr.bf16.mxu0 0
      %1371 = vmatpush2.bf16.msra.mxu0 0
      %1372 = vmatprep.subr.bf16.mxu0 0
      %1373 = vmatpush2.bf16.msra.mxu0 0
      %1374 = vmatprep.subr.bf16.mxu0 0
      %1375 = vmatpush2.bf16.msra.mxu0 0
      %1376 = vmatprep.subr.bf16.mxu0 0
      %1377 = vmatpush2.bf16.msra.mxu0 0
      %1378 = vmatprep.subr.bf16.mxu0 0
      %1379 = vmatpush2.bf16.msra.mxu0 0
      %1380 = vmatprep.mubr.bf16.mxu0 0
      %1381 = vmatmul.mubr.bf16.gmra.mxu0 %v1276
      %v1382 = vpop.f32.mrf.mxu0
      %v1383 = vadd.f32 %v1298, %v1382
      %v1384 = vpop.f32.mrf.mxu0
      %v1385 = vpop.f32.mrf.mxu0
      %v1386 = vpop.f32.mrf.mxu0
      %1387 = vdwg.mxu0
      %v1388 = vxor.u32 %v1383, 2147483648
      %v1389 = vmul.f32 %v1388, 1.442695
      %v1390 = vpow.pop %v1389
      %v1391 = vadd.f32 %v1390, 1.0
      %v1392 = vrcp.pop %v1391
      %v1393 = vmul.f32 1.0, %v1392
      %1394 = vst [vmem:[#allocation4] sm:$0xf] %v1393
    $region33: #{piano_roll_lstm_forward.3} parent=1 // pred_fallthru
      _
    // Predicated region
    $region34: #{piano_roll_lstm_forward.3} parent=1 // pred_check
      _
    $region35: #{piano_roll_lstm_forward.3} parent=1 // pred_check_branch
      %1396 = sbr.rel (0) target = $region37
    $region36: #{piano_roll_lstm_forward.3} parent=1 // pred_region
      %s1398 = ssub.s32 64, 64
      %1399 = vsyncadd [#allocation5], %s1398
      %s1401 = sshll.u32 [#allocation4], 4
      %s1402 = int_to_ptr.vmem [resolvable:$true] %s1401
      %1404 = dma.vmem_to_hbm [thread:$0]  %s1402, 64, %s6, [#allocation5]
    $region37: #{piano_roll_lstm_forward.3} parent=1 // pred_fallthru
      _
    // Predicated region
    $region38: #{piano_roll_lstm_forward.3} parent=1 // pred_check
      _
    $region39: #{piano_roll_lstm_forward.3} parent=1 // pred_check_branch
      %1406 = sbr.rel (0) target = $region41
    $region40: #{piano_roll_lstm_forward.3} parent=1 // pred_region
      %1407 = dma.done [#allocation5], 64
    $region41: #{piano_roll_lstm_forward.3} parent=1 // pred_fallthru
      _
    %1408 = vsyncpa [#allocation5], 1

</llo_original>
